<compile_context>
chip_gen: v5e
topology: v5e:2x2
jax: 0.10.0
libtpu: 0.0.40
codegen_flags: <defaults>
</compile_context>

<pallas_src>
import jax
import jax.numpy as jnp
from jax import lax
from jax.experimental import pallas as pl
from jax.experimental.pallas import tpu as pltpu


# --------------------------- VMEM / tiling policy ----------------------------

def _vmem_limit_bytes():
    """Per-generation scoped-VMEM limit (~half of physical VMEM)."""
    try:
        cap = pltpu.get_tpu_info().vmem_capacity_bytes
    except Exception:
        cap = 64 << 20                       # conservative (v7x-sized) fallback
    return int(max(32 << 20, min(96 << 20, cap // 2)))


def _choose_tile_h_conv(h, wdim, cin, cout, in_isize, out_isize, budget_bytes,
                        n_batch, *, target_m=256, min_grid_steps=4):
    """Largest divisor of H whose per-tile footprint fits the budget (dtype-aware)."""
    def footprint(th):
        in_tile = th * wdim * cin * in_isize
        halo = 2 * wdim * cin * in_isize
        out_tile = 4 * th * wdim * cout * out_isize
        weights = 2 * (4 * cin) * (2 * cout) * in_isize
        slab = (th + 2) * (wdim + 2) * cin * in_isize        # padded input slab
        patch = (th + 1) * wdim * (4 * cin) * in_isize       # one im2col patch
        res = (th + 1) * wdim * (2 * cout) * 4               # f32 dot result
        # blocks are double-buffered by the BlockSpec pipeline; values live once.
        return 2 * (in_tile + halo + out_tile + weights) + slab + patch + res

    divs = [d for d in range(1, h + 1) if h % d == 0 and footprint(d) <= budget_bytes]
    if not divs:
        return 1
    th = max(divs)                                           # maximize the dot's M
    if n_batch * (h // th) < min_grid_steps:
        # Prefer a few grid steps (megacore / DMA pipelining), but never at the
        # cost of dropping M = TH*W below the MXU row count.
        better = [d for d in divs
                  if d * wdim >= target_m and n_batch * (h // d) >= min_grid_steps]
        if better:
            th = max(better)
    return th


def _choose_tile_h_copy(h, wdim, c, isize, budget_bytes):
    """Tile height for the pure nearest-2x (bandwidth-bound) kernel."""
    def footprint(th):
        return 2 * (th * wdim * c + 4 * th * wdim * c) * isize   # 2x-buffered in/out
    divs = [d for d in range(1, h + 1) if h % d == 0 and footprint(d) <= budget_bytes]
    return max(divs) if divs else 1


# ----------------------- fused nearest-2x + conv3x3 --------------------------

def _merged_parity_weights(w_hwio, dtype):
    """Fold a (3,3,Cin,Cout) kernel into (2[pw], 4*Cin, 2[ph]*Cout).

    Output pixel (2i+ph, 2j+pw) of conv(upsample2x(x)) only touches the 2x2
    input neighbourhood rows {i-1+ph, i+ph} x cols {j-1+pw, j+pw}; the three
    3x3 taps collapse onto two with summed weights.  K-order is (dy, dx, cin)
    to match the kernel's im2col concat; the two height parities are stacked
    along N so a single dot produces both.
    """
    w32 = w_hwio.astype(jnp.float32)                 # fold in f32, cast at the end
    r = jnp.array([[[1., 0., 0.],
                    [0., 1., 1.]],
                   [[1., 1., 0.],
                    [0., 0., 1.]]], jnp.float32)     # r[parity, d, ktap]
    w_eff = jnp.einsum('pdy,qex,yxio->pqdeio', r, r, w32)   # (ph,pw,dy,dx,Ci,Co)
    _, _, cin, cout = w_hwio.shape
    w_eff = w_eff.reshape(2, 2, 4 * cin, cout)               # (ph, pw, K, Co)
    w_m = jnp.transpose(w_eff, (1, 2, 0, 3)).reshape(2, 4 * cin, 2 * cout)
    return w_m.astype(dtype)


def _upsample_conv_kernel(xb_ref, xtop_ref, xbot_ref, w_ref, b_ref, o_ref):
    # xb_ref:   (1, TH, W, Cin)       body rows of the input tile
    # xtop_ref: (1, 1,  W, Cin)       input row just above the tile (clamped)
    # xbot_ref: (1, 1,  W, Cin)       input row just below the tile (clamped)
    # w_ref:    (2, 4*Cin, 2*Cout)    [pw, (dy,dx,cin), (ph,cout)] merged weights
    # b_ref:    (1, Cout)
    # o_ref:    (1, 2, 2, TH, W, Cout)  parity-blocked output [ph, pw]
    t = pl.program_id(1)
    nt = pl.num_programs(1)
    _, th, wdim, cin = xb_ref.shape
    cout = b_ref.shape[-1]

    # (TH+2, W+2, Cin) zero-padded slab, built in VMEM only.  The clamped halo
    # rows of the first / last tile are the conv's zero-padding rows.
    top = xtop_ref[0]
    bot = xbot_ref[0]
    top = jnp.where(t == 0, jnp.zeros_like(top), top)
    bot = jnp.where(t == nt - 1, jnp.zeros_like(bot), bot)
    xs = jnp.concatenate([top, xb_ref[0], bot], axis=0)          # (TH+2, W, C)
    zc = jnp.zeros((th + 2, 1, cin), xs.dtype)
    xp = jnp.concatenate([zc, xs, zc], axis=1)                   # (TH+2, W+2, C)

    bias = b_ref[...].astype(jnp.float32).reshape(1, 1, cout)

    for pw in range(2):                                          # 2 dots per tile
        # im2col patch over the 2x2 window of this width parity, evaluated at
        # TH+1 row positions so BOTH height parities read it (ph=1 is the same
        # patch shifted one row down -> free major-dim slice of the result).
        patch = jnp.concatenate(
            [xp[dy:dy + th + 1, pw + dx:pw + dx + wdim, :]
             for dy in range(2) for dx in range(2)], axis=-1)    # (TH+1, W, 4C)
        res = jnp.dot(patch.reshape((th + 1) * wdim, 4 * cin), w_ref[pw],
                      preferred_element_type=jnp.float32)        # ((TH+1)*W, 2Co)
        res = res.reshape(th + 1, wdim, 2 * cout)
        # ph split: rows [0:TH] x lane block 0  /  rows [1:TH+1] x lane block 1.
        o_ref[0, 0, pw] = (res[:th, :, :cout] + bias).astype(o_ref.dtype)
        o_ref[0, 1, pw] = (res[1:, :, cout:] + bias).astype(o_ref.dtype)


def upsample_conv3x3_parity(x, w_hwio, b, *, tile_h=None):
    """Fused nearest-2x + 3x3 conv (pad=1).  x: (N,H,W,Cin) -> (N,2,2,H,W,Cout)
    parity-blocked: out[n, ph, pw, i, j] is output pixel (2i+ph, 2j+pw)."""
    n, h, wdim, cin = x.shape
    cout = w_hwio.shape[-1]
    in_isize = jnp.dtype(x.dtype).itemsize
    limit = _vmem_limit_bytes()
    if tile_h is None:
        tile_h = _choose_tile_h_conv(h, wdim, cin, cout, in_isize, in_isize,
                                     int(limit * 0.8), n)
    if h % tile_h != 0:
        raise ValueError(f"tile_h={tile_h} must divide H={h}")
    th = tile_h

    w_m = _merged_parity_weights(w_hwio, x.dtype)
    b2 = b.reshape(1, cout).astype(jnp.float32)

    body_spec = pl.BlockSpec((1, th, wdim, cin), lambda i, t: (i, t, 0, 0))
    # 1-row halo blocks; index maps clamp at the image edge (zeroed in-kernel).
    top_spec = pl.BlockSpec((1, 1, wdim, cin),
                            lambda i, t: (i, jnp.maximum(t * th - 1, 0), 0, 0))
    bot_spec = pl.BlockSpec((1, 1, wdim, cin),
                            lambda i, t: (i, jnp.minimum(t * th + th, h - 1), 0, 0))
    w_spec = pl.BlockSpec((2, 4 * cin, 2 * cout), lambda i, t: (0, 0, 0))
    b_spec = pl.BlockSpec((1, cout), lambda i, t: (0, 0))
    out_spec = pl.BlockSpec((1, 2, 2, th, wdim, cout),
                            lambda i, t: (i, 0, 0, t, 0, 0))

    return pl.pallas_call(
        _upsample_conv_kernel,
        grid=(n, h // th),
        in_specs=[body_spec, top_spec, bot_spec, w_spec, b_spec],
        out_specs=out_spec,
        out_shape=jax.ShapeDtypeStruct((n, 2, 2, h, wdim, cout), x.dtype),
        compiler_params=pltpu.CompilerParams(
            dimension_semantics=("parallel", "parallel"),
            vmem_limit_bytes=limit),
    )(x, x, x, w_m, b2)


# ----------------------------- nearest-2x only -------------------------------

def _nearest2x_kernel(x_ref, o_ref):
    xv = x_ref[0]                                    # (TH, W, C)
    for ph in range(2):
        for pw in range(2):
            o_ref[0, ph, pw] = xv                    # dense, lane-major stores


def upsample_nearest2x_parity(x, *, tile_h=None):
    n, h, wdim, c = x.shape
    isize = jnp.dtype(x.dtype).itemsize
    limit = _vmem_limit_bytes()
    if tile_h is None:
        tile_h = _choose_tile_h_copy(h, wdim, c, isize, int(limit * 0.8))
    if h % tile_h != 0:
        raise ValueError(f"tile_h={tile_h} must divide H={h}")
    th = tile_h
    return pl.pallas_call(
        _nearest2x_kernel,
        grid=(n, h // th),
        in_specs=[pl.BlockSpec((1, th, wdim, c), lambda i, t: (i, t, 0, 0))],
        out_specs=pl.BlockSpec((1, 2, 2, th, wdim, c),
                               lambda i, t: (i, 0, 0, t, 0, 0)),
        out_shape=jax.ShapeDtypeStruct((n, 2, 2, h, wdim, c), x.dtype),
        compiler_params=pltpu.CompilerParams(
            dimension_semantics=("parallel", "parallel"),
            vmem_limit_bytes=limit),
    )(x)


# ----------------------------- module forward --------------------------------

def upsample_forward(x_nchw, params, with_conv, *, tile_h=None):
    """Forward of VQGAN `Upsample` with PyTorch NCHW in/out."""
    x = jnp.transpose(x_nchw, (0, 2, 3, 1))          # NCHW -> NHWC (layout plumbing)
    if with_conv:
        y6 = upsample_conv3x3_parity(x, params['conv_w'], params['conv_b'],
                                     tile_h=tile_h)
    else:
        y6 = upsample_nearest2x_parity(x, tile_h=tile_h)
    n, _, _, h, wdim, c = y6.shape
    # The NHWC->NCHW transpose the module needs anyway also un-blocks the
    # parities: (n, ph, pw, i, j, c) -> (n, c, i, ph, j, pw) -> (n, c, 2h, 2w).
    return jnp.transpose(y6, (0, 5, 3, 1, 4, 2)).reshape(n, c, 2 * h, 2 * wdim)


# ------------------------------ reference ------------------------------------

def _upsample_ref(x_nchw, w_hwio, b, with_conv):
    xu = jnp.repeat(jnp.repeat(x_nchw, 2, axis=2), 2, axis=3)
    if not with_conv:
        return xu
    y = lax.conv_general_dilated(
        xu, w_hwio, window_strides=(1, 1), padding=((1, 1), (1, 1)),
        dimension_numbers=('NCHW', 'HWIO', 'NCHW'),
        precision=lax.Precision.HIGHEST)
    return y + b[None, :, None, None]


# --------------------------------- main ---------------------------------------

if __name__ == "__main__":
    key = jax.random.PRNGKey(0)
    kx, kw, kb = jax.random.split(key, 3)
    N, C, H, W = 2, 128, 16, 16
    x = jax.random.normal(kx, (N, C, H, W), jnp.float32)
    w = jax.random.normal(kw, (3, 3, C, C), jnp.float32) / jnp.sqrt(9.0 * C)
    b = 0.01 * jax.random.normal(kb, (C,), jnp.float32)
    params = {'conv_w': w, 'conv_b': b}

    ref = _upsample_ref(x, w, b, True)
    scale = max(float(jnp.max(jnp.abs(ref))), 1.0)
    tol = 5e-3 * scale                                # relative-style tolerance

    # with_conv=True, multi-tile grid (exercises the H-halo path).
    out = jax.block_until_ready(upsample_forward(x, params, with_conv=True, tile_h=4))
    assert out.shape == (N, C, 2 * H, 2 * W), out.shape
    assert float(jnp.max(jnp.abs(out - ref))) <= tol

    # with_conv=True, auto-chosen tile (single H-tile per image, M=(TH+1)*W=272).
    out2 = jax.block_until_ready(upsample_forward(x, params, with_conv=True))
    assert float(jnp.max(jnp.abs(out2 - ref))) <= tol

    # with_conv=False (pure nearest upsample): exact match expected.
    out3 = jax.block_until_ready(upsample_forward(x, {}, with_conv=False, tile_h=8))
    ref3 = _upsample_ref(x, None, None, False)
    assert out3.shape == (N, C, 2 * H, 2 * W)
    assert bool(jnp.all(out3 == ref3))

    print("KERNEL_OK")
</pallas_src>

<mosaic_0001>
module attributes {stable_mosaic.version = 11 : i64} {
  func.func @_upsample_conv_kernel(%arg0: i32, %arg1: i32, %arg2: memref<1x4x16x128xf32, #tpu.memory_space<vmem>>, %arg3: memref<1x1x16x128xf32, #tpu.memory_space<vmem>>, %arg4: memref<1x1x16x128xf32, #tpu.memory_space<vmem>>, %arg5: memref<2x512x256xf32, #tpu.memory_space<vmem>>, %arg6: memref<1x128xf32, #tpu.memory_space<vmem>>, %arg7: memref<1x2x2x4x16x128xf32, #tpu.memory_space<vmem>>) attributes {dimension_semantics = [#tpu.dimension_semantics<parallel>, #tpu.dimension_semantics<parallel>], iteration_bounds = array<i64: 2, 4>, scalar_prefetch = 0 : i64, scratch_operands = 0 : i64, tpu.core_type = #tpu.core_type<tc>, window_params = [{transform_indices = @transform_0, window_bounds = array<i64: 1, 4, 16, 128>}, {transform_indices = @transform_1, window_bounds = array<i64: 1, 1, 16, 128>}, {transform_indices = @transform_2, window_bounds = array<i64: 1, 1, 16, 128>}, {pipeline_mode = #tpu.pipeline_mode<synchronous>, transform_indices = @transform_3, window_bounds = array<i64: 2, 512, 256>}, {pipeline_mode = #tpu.pipeline_mode<synchronous>, transform_indices = @transform_4, window_bounds = array<i64: 1, 128>}, {transform_indices = @transform_5, window_bounds = array<i64: 1, 2, 2, 4, 16, 128>}]} {
    %c0 = arith.constant 0 : index
    %c0_0 = arith.constant 0 : index
    %c0_1 = arith.constant 0 : index
    %c0_2 = arith.constant 0 : index
    %0 = vector.load %arg3[%c0, %c0_0, %c0_1, %c0_2] : memref<1x1x16x128xf32, #tpu.memory_space<vmem>>, vector<1x1x16x128xf32>
    %1 = vector.shape_cast %0 : vector<1x1x16x128xf32> to vector<1x16x128xf32>
    %c0_3 = arith.constant 0 : index
    %c0_4 = arith.constant 0 : index
    %c0_5 = arith.constant 0 : index
    %c0_6 = arith.constant 0 : index
    %2 = vector.load %arg4[%c0_3, %c0_4, %c0_5, %c0_6] : memref<1x1x16x128xf32, #tpu.memory_space<vmem>>, vector<1x1x16x128xf32>
    %3 = vector.shape_cast %2 : vector<1x1x16x128xf32> to vector<1x16x128xf32>
    %c0_i32 = arith.constant 0 : i32
    %4 = arith.cmpi eq, %arg1, %c0_i32 : i32
    %cst = arith.constant 0.000000e+00 : f32
    %5 = vector.broadcast %cst : f32 to vector<1x16x128xf32>
    %6 = arith.select %4, %5, %1 : vector<1x16x128xf32>
    %c3_i32 = arith.constant 3 : i32
    %7 = arith.cmpi eq, %arg1, %c3_i32 : i32
    %cst_7 = arith.constant 0.000000e+00 : f32
    %8 = vector.broadcast %cst_7 : f32 to vector<1x16x128xf32>
    %9 = arith.select %7, %8, %3 : vector<1x16x128xf32>
    %c0_8 = arith.constant 0 : index
    %c0_9 = arith.constant 0 : index
    %c0_10 = arith.constant 0 : index
    %c0_11 = arith.constant 0 : index
    %10 = vector.load %arg2[%c0_8, %c0_9, %c0_10, %c0_11] : memref<1x4x16x128xf32, #tpu.memory_space<vmem>>, vector<1x4x16x128xf32>
    %11 = vector.shape_cast %10 : vector<1x4x16x128xf32> to vector<4x16x128xf32>
    %12 = tpu.concatenate %6, %11, %9 in 0 : vector<1x16x128xf32>, vector<4x16x128xf32>, vector<1x16x128xf32> -> vector<6x16x128xf32>
    %cst_12 = arith.constant 0.000000e+00 : f32
    %13 = vector.broadcast %cst_12 : f32 to vector<6x1x128xf32>
    %14 = tpu.concatenate %13, %12, %13 in 1 : vector<6x1x128xf32>, vector<6x16x128xf32>, vector<6x1x128xf32> -> vector<6x18x128xf32>
    %c0_13 = arith.constant 0 : index
    %c0_14 = arith.constant 0 : index
    %15 = vector.load %arg6[%c0_13, %c0_14] : memref<1x128xf32, #tpu.memory_space<vmem>>, vector<1x128xf32>
    %16 = vector.shape_cast %15 : vector<1x128xf32> to vector<1x1x128xf32>
    %17 = vector.extract_strided_slice %14 {offsets = [0, 0, 0], sizes = [5, 16, 128], strides = [1, 1, 1]} : vector<6x18x128xf32> to vector<5x16x128xf32>
    %18 = vector.extract_strided_slice %14 {offsets = [0, 1, 0], sizes = [5, 16, 128], strides = [1, 1, 1]} : vector<6x18x128xf32> to vector<5x16x128xf32>
    %19 = vector.extract_strided_slice %14 {offsets = [1, 0, 0], sizes = [5, 16, 128], strides = [1, 1, 1]} : vector<6x18x128xf32> to vector<5x16x128xf32>
    %20 = vector.extract_strided_slice %14 {offsets = [1, 1, 0], sizes = [5, 16, 128], strides = [1, 1, 1]} : vector<6x18x128xf32> to vector<5x16x128xf32>
    %21 = tpu.concatenate %17, %18, %19, %20 in 2 : vector<5x16x128xf32>, vector<5x16x128xf32>, vector<5x16x128xf32>, vector<5x16x128xf32> -> vector<5x16x512xf32>
    %22 = vector.shape_cast %21 : vector<5x16x512xf32> to vector<80x512xf32>
    %c0_15 = arith.constant 0 : index
    %c0_16 = arith.constant 0 : index
    %c0_17 = arith.constant 0 : index
    %23 = vector.load %arg5[%c0_15, %c0_16, %c0_17] : memref<2x512x256xf32, #tpu.memory_space<vmem>>, vector<1x512x256xf32>
    %24 = vector.shape_cast %23 : vector<1x512x256xf32> to vector<512x256xf32>
    %cst_18 = arith.constant dense<0.000000e+00> : vector<80x256xf32>
    %25 = tpu.matmul %22, %24, %cst_18 {dimension_numbers = #tpu.dot_dimension_numbers<[1], [0], [0], [1], [0, 0, 1, 1], [], []>} : vector<80x512xf32>, vector<512x256xf32>, vector<80x256xf32> -> vector<80x256xf32>
    %26 = vector.shape_cast %25 : vector<80x256xf32> to vector<5x16x256xf32>
    %27 = vector.extract_strided_slice %26 {offsets = [0, 0, 0], sizes = [4, 16, 128], strides = [1, 1, 1]} : vector<5x16x256xf32> to vector<4x16x128xf32>
    %28 = vector.broadcast %16 : vector<1x1x128xf32> to vector<4x16x128xf32>
    %29 = arith.addf %27, %28 : vector<4x16x128xf32>
    %c0_19 = arith.constant 0 : index
    %c0_20 = arith.constant 0 : index
    %c0_21 = arith.constant 0 : index
    %c0_22 = arith.constant 0 : index
    %c0_23 = arith.constant 0 : index
    %c0_24 = arith.constant 0 : index
    %30 = vector.load %arg7[%c0_19, %c0_20, %c0_21, %c0_22, %c0_23, %c0_24] : memref<1x2x2x4x16x128xf32, #tpu.memory_space<vmem>>, vector<1x1x1x4x16x128xf32>
    %31 = vector.shape_cast %30 : vector<1x1x1x4x16x128xf32> to vector<4x16x128xf32>
    %32 = vector.shape_cast %29 : vector<4x16x128xf32> to vector<1x1x1x4x16x128xf32>
    tpu.vector_store %arg7[%c0_19, %c0_20, %c0_21, %c0_22, %c0_23, %c0_24], %32 {strides = array<i32>} : memref<1x2x2x4x16x128xf32, #tpu.memory_space<vmem>>, vector<1x1x1x4x16x128xf32>,
    %33 = vector.extract_strided_slice %26 {offsets = [1, 0, 128], sizes = [4, 16, 128], strides = [1, 1, 1]} : vector<5x16x256xf32> to vector<4x16x128xf32>
    %34 = vector.broadcast %16 : vector<1x1x128xf32> to vector<4x16x128xf32>
    %35 = arith.addf %33, %34 : vector<4x16x128xf32>
    %c0_25 = arith.constant 0 : index
    %c1 = arith.constant 1 : index
    %c0_26 = arith.constant 0 : index
    %c0_27 = arith.constant 0 : index
    %c0_28 = arith.constant 0 : index
    %c0_29 = arith.constant 0 : index
    %36 = vector.load %arg7[%c0_25, %c1, %c0_26, %c0_27, %c0_28, %c0_29] : memref<1x2x2x4x16x128xf32, #tpu.memory_space<vmem>>, vector<1x1x1x4x16x128xf32>
    %37 = vector.shape_cast %36 : vector<1x1x1x4x16x128xf32> to vector<4x16x128xf32>
    %38 = vector.shape_cast %35 : vector<4x16x128xf32> to vector<1x1x1x4x16x128xf32>
    tpu.vector_store %arg7[%c0_25, %c1, %c0_26, %c0_27, %c0_28, %c0_29], %38 {strides = array<i32>} : memref<1x2x2x4x16x128xf32, #tpu.memory_space<vmem>>, vector<1x1x1x4x16x128xf32>,
    %39 = vector.extract_strided_slice %14 {offsets = [0, 1, 0], sizes = [5, 16, 128], strides = [1, 1, 1]} : vector<6x18x128xf32> to vector<5x16x128xf32>
    %40 = vector.extract_strided_slice %14 {offsets = [0, 2, 0], sizes = [5, 16, 128], strides = [1, 1, 1]} : vector<6x18x128xf32> to vector<5x16x128xf32>
    %41 = vector.extract_strided_slice %14 {offsets = [1, 1, 0], sizes = [5, 16, 128], strides = [1, 1, 1]} : vector<6x18x128xf32> to vector<5x16x128xf32>
    %42 = vector.extract_strided_slice %14 {offsets = [1, 2, 0], sizes = [5, 16, 128], strides = [1, 1, 1]} : vector<6x18x128xf32> to vector<5x16x128xf32>
    %43 = tpu.concatenate %39, %40, %41, %42 in 2 : vector<5x16x128xf32>, vector<5x16x128xf32>, vector<5x16x128xf32>, vector<5x16x128xf32> -> vector<5x16x512xf32>
    %44 = vector.shape_cast %43 : vector<5x16x512xf32> to vector<80x512xf32>
    %c1_30 = arith.constant 1 : index
    %c0_31 = arith.constant 0 : index
    %c0_32 = arith.constant 0 : index
    %45 = vector.load %arg5[%c1_30, %c0_31, %c0_32] : memref<2x512x256xf32, #tpu.memory_space<vmem>>, vector<1x512x256xf32>
    %46 = vector.shape_cast %45 : vector<1x512x256xf32> to vector<512x256xf32>
    %cst_33 = arith.constant dense<0.000000e+00> : vector<80x256xf32>
    %47 = tpu.matmul %44, %46, %cst_33 {dimension_numbers = #tpu.dot_dimension_numbers<[1], [0], [0], [1], [0, 0, 1, 1], [], []>} : vector<80x512xf32>, vector<512x256xf32>, vector<80x256xf32> -> vector<80x256xf32>
    %48 = vector.shape_cast %47 : vector<80x256xf32> to vector<5x16x256xf32>
    %49 = vector.extract_strided_slice %48 {offsets = [0, 0, 0], sizes = [4, 16, 128], strides = [1, 1, 1]} : vector<5x16x256xf32> to vector<4x16x128xf32>
    %50 = vector.broadcast %16 : vector<1x1x128xf32> to vector<4x16x128xf32>
    %51 = arith.addf %49, %50 : vector<4x16x128xf32>
    %c0_34 = arith.constant 0 : index
    %c0_35 = arith.constant 0 : index
    %c1_36 = arith.constant 1 : index
    %c0_37 = arith.constant 0 : index
    %c0_38 = arith.constant 0 : index
    %c0_39 = arith.constant 0 : index
    %52 = vector.load %arg7[%c0_34, %c0_35, %c1_36, %c0_37, %c0_38, %c0_39] : memref<1x2x2x4x16x128xf32, #tpu.memory_space<vmem>>, vector<1x1x1x4x16x128xf32>
    %53 = vector.shape_cast %52 : vector<1x1x1x4x16x128xf32> to vector<4x16x128xf32>
    %54 = vector.shape_cast %51 : vector<4x16x128xf32> to vector<1x1x1x4x16x128xf32>
    tpu.vector_store %arg7[%c0_34, %c0_35, %c1_36, %c0_37, %c0_38, %c0_39], %54 {strides = array<i32>} : memref<1x2x2x4x16x128xf32, #tpu.memory_space<vmem>>, vector<1x1x1x4x16x128xf32>,
    %55 = vector.extract_strided_slice %48 {offsets = [1, 0, 128], sizes = [4, 16, 128], strides = [1, 1, 1]} : vector<5x16x256xf32> to vector<4x16x128xf32>
    %56 = vector.broadcast %16 : vector<1x1x128xf32> to vector<4x16x128xf32>
    %57 = arith.addf %55, %56 : vector<4x16x128xf32>
    %c0_40 = arith.constant 0 : index
    %c1_41 = arith.constant 1 : index
    %c1_42 = arith.constant 1 : index
    %c0_43 = arith.constant 0 : index
    %c0_44 = arith.constant 0 : index
    %c0_45 = arith.constant 0 : index
    %58 = vector.load %arg7[%c0_40, %c1_41, %c1_42, %c0_43, %c0_44, %c0_45] : memref<1x2x2x4x16x128xf32, #tpu.memory_space<vmem>>, vector<1x1x1x4x16x128xf32>
    %59 = vector.shape_cast %58 : vector<1x1x1x4x16x128xf32> to vector<4x16x128xf32>
    %60 = vector.shape_cast %57 : vector<4x16x128xf32> to vector<1x1x1x4x16x128xf32>
    tpu.vector_store %arg7[%c0_40, %c1_41, %c1_42, %c0_43, %c0_44, %c0_45], %60 {strides = array<i32>} : memref<1x2x2x4x16x128xf32, #tpu.memory_space<vmem>>, vector<1x1x1x4x16x128xf32>,
    return
  }
  func.func @transform_0(%arg0: i32, %arg1: i32) -> (i32, i32, i32, i32) {
    %c0_i32 = arith.constant 0 : i32
    %c0_i32_0 = arith.constant 0 : i32
    %c0_i32_1 = arith.constant 0 : i32
    return %arg0, %arg1, %c0_i32, %c0_i32_0 : i32, i32, i32, i32
  }
  func.func @transform_1(%arg0: i32, %arg1: i32) -> (i32, i32, i32, i32) {
    %c4_i32 = arith.constant 4 : i32
    %0 = arith.muli %arg1, %c4_i32 : i32
    %c1_i32 = arith.constant 1 : i32
    %1 = arith.subi %0, %c1_i32 : i32
    %c0_i32 = arith.constant 0 : i32
    %2 = arith.maxsi %1, %c0_i32 : i32
    %c0_i32_0 = arith.constant 0 : i32
    %c0_i32_1 = arith.constant 0 : i32
    %c0_i32_2 = arith.constant 0 : i32
    return %arg0, %2, %c0_i32_0, %c0_i32_1 : i32, i32, i32, i32
  }
  func.func @transform_2(%arg0: i32, %arg1: i32) -> (i32, i32, i32, i32) {
    %c4_i32 = arith.constant 4 : i32
    %0 = arith.muli %arg1, %c4_i32 : i32
    %c4_i32_0 = arith.constant 4 : i32
    %1 = arith.addi %0, %c4_i32_0 : i32
    %c15_i32 = arith.constant 15 : i32
    %2 = arith.minsi %1, %c15_i32 : i32
    %c0_i32 = arith.constant 0 : i32
    %c0_i32_1 = arith.constant 0 : i32
    %c0_i32_2 = arith.constant 0 : i32
    return %arg0, %2, %c0_i32, %c0_i32_1 : i32, i32, i32, i32
  }
  func.func @transform_3(%arg0: i32, %arg1: i32) -> (i32, i32, i32) {
    %c0_i32 = arith.constant 0 : i32
    %c0_i32_0 = arith.constant 0 : i32
    %c0_i32_1 = arith.constant 0 : i32
    %c0_i32_2 = arith.constant 0 : i32
    return %c0_i32, %c0_i32_0, %c0_i32_1 : i32, i32, i32
  }
  func.func @transform_4(%arg0: i32, %arg1: i32) -> (i32, i32) {
    %c0_i32 = arith.constant 0 : i32
    %c0_i32_0 = arith.constant 0 : i32
    %c0_i32_1 = arith.constant 0 : i32
    return %c0_i32, %c0_i32_0 : i32, i32
  }
  func.func @transform_5(%arg0: i32, %arg1: i32) -> (i32, i32, i32, i32, i32, i32) {
    %c0_i32 = arith.constant 0 : i32
    %c0_i32_0 = arith.constant 0 : i32
    %c0_i32_1 = arith.constant 0 : i32
    %c0_i32_2 = arith.constant 0 : i32
    %c0_i32_3 = arith.constant 0 : i32
    return %arg0, %c0_i32, %c0_i32_0, %arg1, %c0_i32_1, %c0_i32_2 : i32, i32, i32, i32, i32, i32
  }
}

</mosaic_0001>

<llo_original>
// kernel: tpu_custom_call.1
$region0: #{tpu_custom_call.1}
  #allocation0 [shape = 'u32[]', space=smem, size = 0x4, offset = 0x4, fixed_abs, tag = 'smem constant byte address 0x4 - core index']
  #allocation1 [shape = 'u32[72,128]{1,0:T(1,128)}', space=vmem, size = 0x9000, scoped, tag = 'internal scratch']
  #allocation11 [shape = 's32[]', space=sflag, size = 0x4, offset = 0, fixed_abs, tag = 'sflag constant byte address 0x0 - dummy sync flag']
  %s0 = inlined_call_operand.hbm [shape: f32[2,16,16,128], index: 0, kind: input, shape index: {}]
  %s1 = inlined_call_operand.hbm [shape: f32[2,16,16,128], index: 1, kind: input, shape index: {}]
  %s2 = inlined_call_operand.hbm [shape: f32[2,16,16,128], index: 2, kind: input, shape index: {}]
  %s3 = inlined_call_operand.hbm [shape: f32[2,512,256], index: 3, kind: input, shape index: {}]
  %s4 = inlined_call_operand.vmem [shape: f32[1,128], index: 4, kind: input, shape index: {}]
  %s5 = inlined_call_operand.hbm [shape: f32[2,2,2,16,16,128], index: 5, kind: output, shape index: {}]
  %s6 = sld [smem:[#allocation0]]
  $region69: #{tpu_custom_call.1} parent=0
    _
  %s8 = ssub.s32 1, %s6
  %s9 = scalar_select 0, %s8, %s6
  $region1: #{tpu_custom_call.1} parent=0
    #allocation2 [shape = 'u8[65536]{0}', space=vmem, size = 0x10000, scoped, tag = 'input window, operand 0']
    #allocation3 [shape = 's32[2]{0}', space=sflag, size = 0x8, scoped, tag = 'scoped memory for tpu_custom_call.1']
    #allocation4 [shape = 's32[2]{0}', space=sflag, size = 0x8, scoped, tag = 'scoped memory for tpu_custom_call.1']
    #allocation5 [shape = 'u8[16384]{0}', space=vmem, size = 0x4000, scoped, tag = 'input window, operand 1']
    #allocation6 [shape = 's32[2]{0}', space=sflag, size = 0x8, scoped, tag = 'scoped memory for tpu_custom_call.1']
    #allocation7 [shape = 'u8[16384]{0}', space=vmem, size = 0x4000, scoped, tag = 'input window, operand 2']
    #allocation8 [shape = 'u8[1048576]{0}', space=vmem, size = 0x100000, scoped, tag = 'input window, operand 3, single buffered']
    #allocation9 [shape = 's32[1]{0}', space=sflag, size = 0x4, scoped, tag = 'scoped memory for tpu_custom_call.1']
    #allocation10 [shape = 'u8[262144]{0}', space=vmem, size = 0x40000, scoped, tag = 'output window, operand 0']
    %10 = vsyncpa [#allocation3], 0
    %s11 = scalar_lea.sflag [#allocation3], 1
    %12 = vsyncpa %s11, 0
    %13 = vsyncpa [#allocation6], 0
    %s14 = scalar_lea.sflag [#allocation6], 1
    %15 = vsyncpa %s14, 0
    %16 = vsyncpa [#allocation9], 0
    %17 = vsyncpa [#allocation4], 0
    %s18 = scalar_lea.sflag [#allocation4], 1
    %19 = vsyncpa %s18, 0
    loop: start=0, step=1, limit=10
    $region2: #{tpu_custom_call.1} parent=1 // loop_pre_header
      _
    $region3: #{tpu_custom_call.1} parent=1 // loop_header
      %s21 = sphi 0, %s25
      %p22 = scmp.ge.s32.totalorder %s21, 10
      %s28 = sphi 0, %s40
      %s29 = sphi 0, %s36
      %s30 = sphi 0, %s28
      %s31 = sphi 0, %s29
      %s32 = sphi 0, %s30
      %s33 = sphi 0, %s31
      %s45 = sphi 0, %s47
      %s48 = sphi 0, %s45
      %s49 = sphi 0, %s48
      %s65 = sphi 0, %s49
      %s81 = sphi 0, %s83
      %s84 = sphi 0, %s81
      %s85 = sphi 0, %s84
      %s101 = sphi 0, %s85
      %s117 = sphi 0, %s119
      %s120 = sphi 0, %s117
      %s121 = sphi 0, %s120
      %s137 = sphi 0, %s121
      %s141 = sphi 0, %s141
      %s143 = sphi 0, %s141
      %s144 = sphi 0, %s143
      %s158 = sphi 0, %s144
      %s162 = sphi 0, %s162
      %s164 = sphi 0, %s162
      %s165 = sphi 0, %s164
      %s179 = sphi 0, %s165
      %s187 = sphi 0, %s189
      %s190 = sphi 0, %s187
      %s191 = sphi 0, %s190
      %s207 = sphi 0, %s191
    $region4: #{tpu_custom_call.1} parent=1 // loop_header_branch
      %24 = sbr.rel (%p22) target = $region8
    $region5: #{tpu_custom_call.1} parent=1 // loop_body
      %s26 = ssub.s32 %s21, 1
      %s27 = ssub.s32 %s21, 2
      %s34 = sadd.s32 1, %s29
      %p35 = scmp.ge.s32.totalorder %s34, 4
      %s36 = scalar_select %p35, 0, %s34
      %s37 = sadd.s32 1, %s28
      %s38 = scalar_select %p35, %s37, %s28
      %p39 = scmp.ge.s32.totalorder %s38, 2
      %s40 = scalar_select %p39, 0, %s38
      %s41 = ssub.s32 %s28, %s40
      %s42 = ssub.s32 %s29, %s36
      %s43 = sor.u32 %s41, %s42
      %p44 = scmp.eq.s32.totalorder %s43, 0
      %s46 = sadd.s32 %s45, 1
      %s47 = scalar_select %p44, %s45, %s46
      %p50 = pneg %p44
      %p51 = scmp.eq.s32.totalorder %s21, 7
      %p52 = por %p50, %p51
      %p53 = scmp.ne.s32.totalorder %s45, %s48
      %p54 = scmp.eq.s32.totalorder %s21, 0
      %p55 = por %p53, %p54
      %p56 = scmp.ne.s32.totalorder %s45, %s48
      %p57 = scmp.eq.s32.totalorder %s26, 7
      %p58 = por %p56, %p57
      %p59 = scmp.ne.s32.totalorder %s48, %s49
      %p60 = scmp.eq.s32.totalorder %s26, 0
      %p61 = por %p59, %p60
      %p62 = scmp.ne.s32.totalorder %s48, %s49
      %p63 = scmp.eq.s32.totalorder %s27, 7
      %p64 = por %p62, %p63
      %p66 = scmp.ne.s32.totalorder %s49, %s65
      %p67 = scmp.eq.s32.totalorder %s27, 0
      %p68 = por %p66, %p67
      %s69 = smul.u32 %s29, 4
      %s70 = ssub.s32 %s69, 1
      %p71 = scmp.gt.s32.totalorder %s70, 0
      %s72 = scalar_select %p71, %s70, 0
      %s73 = smul.u32 %s36, 4
      %s74 = ssub.s32 %s73, 1
      %p75 = scmp.gt.s32.totalorder %s74, 0
      %s76 = scalar_select %p75, %s74, 0
      %s77 = ssub.s32 %s28, %s40
      %s78 = ssub.s32 %s72, %s76
      %s79 = sor.u32 %s77, %s78
      %p80 = scmp.eq.s32.totalorder %s79, 0
      %s82 = sadd.s32 %s81, 1
      %s83 = scalar_select %p80, %s81, %s82
      %p86 = pneg %p80
      %p87 = scmp.eq.s32.totalorder %s21, 7
      %p88 = por %p86, %p87
      %p89 = scmp.ne.s32.totalorder %s81, %s84
      %p90 = scmp.eq.s32.totalorder %s21, 0
      %p91 = por %p89, %p90
      %p92 = scmp.ne.s32.totalorder %s81, %s84
      %p93 = scmp.eq.s32.totalorder %s26, 7
      %p94 = por %p92, %p93
      %p95 = scmp.ne.s32.totalorder %s84, %s85
      %p96 = scmp.eq.s32.totalorder %s26, 0
      %p97 = por %p95, %p96
      %p98 = scmp.ne.s32.totalorder %s84, %s85
      %p99 = scmp.eq.s32.totalorder %s27, 7
      %p100 = por %p98, %p99
      %p102 = scmp.ne.s32.totalorder %s85, %s101
      %p103 = scmp.eq.s32.totalorder %s27, 0
      %p104 = por %p102, %p103
      %s105 = smul.u32 %s29, 4
      %s106 = sadd.s32 %s105, 4
      %p107 = scmp.lt.s32.totalorder %s106, 15
      %s108 = scalar_select %p107, %s106, 15
      %s109 = smul.u32 %s36, 4
      %s110 = sadd.s32 %s109, 4
      %p111 = scmp.lt.s32.totalorder %s110, 15
      %s112 = scalar_select %p111, %s110, 15
      %s113 = ssub.s32 %s28, %s40
      %s114 = ssub.s32 %s108, %s112
      %s115 = sor.u32 %s113, %s114
      %p116 = scmp.eq.s32.totalorder %s115, 0
      %s118 = sadd.s32 %s117, 1
      %s119 = scalar_select %p116, %s117, %s118
      %p122 = pneg %p116
      %p123 = scmp.eq.s32.totalorder %s21, 7
      %p124 = por %p122, %p123
      %p125 = scmp.ne.s32.totalorder %s117, %s120
      %p126 = scmp.eq.s32.totalorder %s21, 0
      %p127 = por %p125, %p126
      %p128 = scmp.ne.s32.totalorder %s117, %s120
      %p129 = scmp.eq.s32.totalorder %s26, 7
      %p130 = por %p128, %p129
      %p131 = scmp.ne.s32.totalorder %s120, %s121
      %p132 = scmp.eq.s32.totalorder %s26, 0
      %p133 = por %p131, %p132
      %p134 = scmp.ne.s32.totalorder %s120, %s121
      %p135 = scmp.eq.s32.totalorder %s27, 7
      %p136 = por %p134, %p135
      %p138 = scmp.ne.s32.totalorder %s121, %s137
      %p139 = scmp.eq.s32.totalorder %s27, 0
      %p140 = por %p138, %p139
      %s142 = sadd.s32 %s141, 1
      %p145 = scmp.eq.s32.totalorder %s21, 7
      %p146 = scmp.ne.s32.totalorder %s141, %s143
      %p147 = scmp.eq.s32.totalorder %s21, 0
      %p148 = por %p146, %p147
      %p149 = scmp.ne.s32.totalorder %s141, %s143
      %p150 = scmp.eq.s32.totalorder %s26, 7
      %p151 = por %p149, %p150
      %p152 = scmp.ne.s32.totalorder %s143, %s144
      %p153 = scmp.eq.s32.totalorder %s26, 0
      %p154 = por %p152, %p153
      %p155 = scmp.ne.s32.totalorder %s143, %s144
      %p156 = scmp.eq.s32.totalorder %s27, 7
      %p157 = por %p155, %p156
      %p159 = scmp.ne.s32.totalorder %s144, %s158
      %p160 = scmp.eq.s32.totalorder %s27, 0
      %p161 = por %p159, %p160
      %s163 = sadd.s32 %s162, 1
      %p166 = scmp.eq.s32.totalorder %s21, 7
      %p167 = scmp.ne.s32.totalorder %s162, %s164
      %p168 = scmp.eq.s32.totalorder %s21, 0
      %p169 = por %p167, %p168
      %p170 = scmp.ne.s32.totalorder %s162, %s164
      %p171 = scmp.eq.s32.totalorder %s26, 7
      %p172 = por %p170, %p171
      %p173 = scmp.ne.s32.totalorder %s164, %s165
      %p174 = scmp.eq.s32.totalorder %s26, 0
      %p175 = por %p173, %p174
      %p176 = scmp.ne.s32.totalorder %s164, %s165
      %p177 = scmp.eq.s32.totalorder %s27, 7
      %p178 = por %p176, %p177
      %p180 = scmp.ne.s32.totalorder %s165, %s179
      %p181 = scmp.eq.s32.totalorder %s27, 0
      %p182 = por %p180, %p181
      %s183 = ssub.s32 %s28, %s40
      %s184 = ssub.s32 %s29, %s36
      %s185 = sor.u32 %s183, %s184
      %p186 = scmp.eq.s32.totalorder %s185, 0
      %s188 = sadd.s32 %s187, 1
      %s189 = scalar_select %p186, %s187, %s188
      %p192 = pneg %p186
      %p193 = scmp.eq.s32.totalorder %s21, 7
      %p194 = por %p192, %p193
      %p195 = scmp.ne.s32.totalorder %s187, %s190
      %p196 = scmp.eq.s32.totalorder %s21, 0
      %p197 = por %p195, %p196
      %p198 = scmp.ne.s32.totalorder %s187, %s190
      %p199 = scmp.eq.s32.totalorder %s26, 7
      %p200 = por %p198, %p199
      %p201 = scmp.ne.s32.totalorder %s190, %s191
      %p202 = scmp.eq.s32.totalorder %s26, 0
      %p203 = por %p201, %p202
      %p204 = scmp.ne.s32.totalorder %s190, %s191
      %p205 = scmp.eq.s32.totalorder %s27, 7
      %p206 = por %p204, %p205
      %p208 = scmp.ne.s32.totalorder %s191, %s207
      %p209 = scmp.eq.s32.totalorder %s27, 0
      %p210 = por %p208, %p209
      %p211 = scmp.le.s32.totalorder 1, %s21
      %p212 = scmp.lt.s32.totalorder %s21, 9
      %p213 = pnand %p211, %p212
      %p214 = pneg %p213
      // Predicated region
      $region9: #{tpu_custom_call.1} parent=5 // pred_check
        _
      $region10: #{tpu_custom_call.1} parent=5 // pred_check_branch
        %216 = sbr.rel (%p213) target = $region12
      $region11: #{tpu_custom_call.1} parent=5 // pred_region
        %s217 = ssub.s32 %s21, 1
        // Predicated region
        $region13: #{tpu_custom_call.1} parent=11 // pred_check
          %p218 = pneg %p154
        $region14: #{tpu_custom_call.1} parent=11 // pred_check_branch
          %220 = sbr.rel (%p218) target = $region16
        $region15: #{tpu_custom_call.1} parent=11 // pred_region
          %222 = vsyncadd [#allocation9], 0
          %s223 = sshll.u32 %s3, 4
          %s224 = int_to_ptr.hbm [resolvable:$true] %s223
          %s225 = sshll.u32 [#allocation8], 4
          %s226 = int_to_ptr.vmem [resolvable:$true] %s225
          %231 = dma.hbm_to_vmem [thread:$0]  %s224, 32768, %s226, [#allocation9], 256, 256, 16
        $region16: #{tpu_custom_call.1} parent=11 // pred_fallthru
          _
        // Predicated region
        $region17: #{tpu_custom_call.1} parent=11 // pred_check
          %p232 = pneg %p175
        $region18: #{tpu_custom_call.1} parent=11 // pred_check_branch
          %234 = sbr.rel (%p232) target = $region20
        $region19: #{tpu_custom_call.1} parent=11 // pred_region
          _
        $region20: #{tpu_custom_call.1} parent=11 // pred_fallthru
          _
      $region12: #{tpu_custom_call.1} parent=5 // pred_fallthru
        _
      %p235 = scmp.lt.s32.totalorder %s21, 8
      // Predicated region
      $region21: #{tpu_custom_call.1} parent=5 // pred_check
        %p236 = pneg %p235
      $region22: #{tpu_custom_call.1} parent=5 // pred_check_branch
        %238 = sbr.rel (%p236) target = $region24
      $region23: #{tpu_custom_call.1} parent=5 // pred_region
        // Predicated region
        $region25: #{tpu_custom_call.1} parent=23 // pred_check
          %p239 = pneg %p55
        $region26: #{tpu_custom_call.1} parent=23 // pred_check_branch
          %241 = sbr.rel (%p239) target = $region28
        $region27: #{tpu_custom_call.1} parent=23 // pred_region
          %s242 = sand.u32 %s45, 1
          %s243 = scalar_lea.sflag [#allocation3], %s242
          %s244 = sand.u32 %s45, 1
          %s245 = smul.addr %s244, 64
          %s246 = scalar_lea.vmem [#allocation2], %s245
          %s247 = smul.u32 4, %s29
          %249 = vsyncadd %s243, 0
          %s250 = smul.addr %s247, 2
          %s251 = smul.addr %s28, 32
          %s252 = sadd.s32 %s250, %s251
          %s253 = smul.addr %s252, 8
          %s254 = scalar_lea.hbm %s0, %s253
          %s255 = sshll.u32 %s254, 4
          %s256 = int_to_ptr.hbm [resolvable:$true] %s255
          %s257 = sshll.u32 %s246, 4
          %s258 = int_to_ptr.vmem [resolvable:$true] %s257
          %263 = dma.hbm_to_vmem [thread:$0]  %s256, 1024, %s258, %s243, 128, 128, 8
        $region28: #{tpu_custom_call.1} parent=23 // pred_fallthru
          _
        // Predicated region
        $region29: #{tpu_custom_call.1} parent=23 // pred_check
          %p264 = pneg %p91
        $region30: #{tpu_custom_call.1} parent=23 // pred_check_branch
          %266 = sbr.rel (%p264) target = $region32
        $region31: #{tpu_custom_call.1} parent=23 // pred_region
          %s267 = sand.u32 %s21, 1
          %s268 = scalar_lea.sflag [#allocation6], %s267
          %s269 = sand.u32 %s81, 1
          %s270 = smul.addr %s269, 16
          %s271 = scalar_lea.vmem [#allocation5], %s270
          %s272 = smul.u32 %s29, 4
          %s273 = ssub.s32 %s272, 1
          %p274 = scmp.gt.s32.totalorder %s273, 0
          %s275 = scalar_select %p274, %s273, 0
          %277 = vsyncadd %s268, 0
          %s278 = smul.addr %s275, 2
          %s279 = smul.addr %s28, 32
          %s280 = sadd.s32 %s278, %s279
          %s281 = smul.addr %s280, 8
          %s282 = scalar_lea.hbm %s1, %s281
          %s283 = sshll.u32 %s282, 4
          %s284 = int_to_ptr.hbm [resolvable:$true] %s283
          %s285 = sshll.u32 %s271, 4
          %s286 = int_to_ptr.vmem [resolvable:$true] %s285
          %291 = dma.hbm_to_vmem [thread:$0]  %s284, 256, %s286, %s268, 128, 128, 8
        $region32: #{tpu_custom_call.1} parent=23 // pred_fallthru
          _
        // Predicated region
        $region33: #{tpu_custom_call.1} parent=23 // pred_check
          %p292 = pneg %p127
        $region34: #{tpu_custom_call.1} parent=23 // pred_check_branch
          %294 = sbr.rel (%p292) target = $region36
        $region35: #{tpu_custom_call.1} parent=23 // pred_region
          %s295 = sand.u32 %s21, 1
          %s296 = scalar_lea.sflag [#allocation6], %s295
          %s297 = sand.u32 %s117, 1
          %s298 = smul.addr %s297, 16
          %s299 = scalar_lea.vmem [#allocation7], %s298
          %s300 = smul.u32 %s29, 4
          %s301 = sadd.s32 %s300, 4
          %p302 = scmp.lt.s32.totalorder %s301, 15
          %s303 = scalar_select %p302, %s301, 15
          %305 = vsyncadd %s296, 0
          %s306 = smul.addr %s303, 2
          %s307 = smul.addr %s28, 32
          %s308 = sadd.s32 %s306, %s307
          %s309 = smul.addr %s308, 8
          %s310 = scalar_lea.hbm %s2, %s309
          %s311 = sshll.u32 %s310, 4
          %s312 = int_to_ptr.hbm [resolvable:$true] %s311
          %s313 = sshll.u32 %s299, 4
          %s314 = int_to_ptr.vmem [resolvable:$true] %s313
          %319 = dma.hbm_to_vmem [thread:$0]  %s312, 256, %s314, %s296, 128, 128, 8
        $region36: #{tpu_custom_call.1} parent=23 // pred_fallthru
          _
      $region24: #{tpu_custom_call.1} parent=5 // pred_fallthru
        _
      %p320 = scmp.le.s32.totalorder 1, %s21
      %p321 = scmp.lt.s32.totalorder %s21, 9
      %p322 = pnand %p320, %p321
      %p323 = pneg %p322
      // Predicated region
      $region37: #{tpu_custom_call.1} parent=5 // pred_check
        _
      $region38: #{tpu_custom_call.1} parent=5 // pred_check_branch
        %325 = sbr.rel (%p322) target = $region40
      $region39: #{tpu_custom_call.1} parent=5 // pred_region
        %s326 = ssub.s32 %s21, 1
        %s327 = sand.u32 %s48, 1
        %s328 = scalar_lea.sflag [#allocation3], %s327
        %s329 = sand.u32 %s48, 1
        %s330 = smul.addr %s329, 64
        %s331 = scalar_lea.vmem [#allocation2], %s330
        // Predicated region
        $region41: #{tpu_custom_call.1} parent=39 // pred_check
          %p332 = pneg %p61
        $region42: #{tpu_custom_call.1} parent=39 // pred_check_branch
          %334 = sbr.rel (%p332) target = $region44
        $region43: #{tpu_custom_call.1} parent=39 // pred_region
          %336 = dma.done %s328, 1024
        $region44: #{tpu_custom_call.1} parent=39 // pred_fallthru
          _
        %s337 = sand.u32 %s26, 1
        %s338 = scalar_lea.sflag [#allocation6], %s337
        %s339 = sand.u32 %s84, 1
        %s340 = smul.addr %s339, 16
        %s341 = scalar_lea.vmem [#allocation5], %s340
        // Predicated region
        $region45: #{tpu_custom_call.1} parent=39 // pred_check
          %p342 = pneg %p97
        $region46: #{tpu_custom_call.1} parent=39 // pred_check_branch
          %344 = sbr.rel (%p342) target = $region48
        $region47: #{tpu_custom_call.1} parent=39 // pred_region
          %346 = dma.done %s338, 256
        $region48: #{tpu_custom_call.1} parent=39 // pred_fallthru
          _
        %s347 = sand.u32 %s26, 1
        %s348 = scalar_lea.sflag [#allocation6], %s347
        %s349 = sand.u32 %s120, 1
        %s350 = smul.addr %s349, 16
        %s351 = scalar_lea.vmem [#allocation7], %s350
        // Predicated region
        $region49: #{tpu_custom_call.1} parent=39 // pred_check
          %p352 = pneg %p133
        $region50: #{tpu_custom_call.1} parent=39 // pred_check_branch
          %354 = sbr.rel (%p352) target = $region52
        $region51: #{tpu_custom_call.1} parent=39 // pred_region
          %356 = dma.done %s348, 256
        $region52: #{tpu_custom_call.1} parent=39 // pred_fallthru
          _
        // Predicated region
        $region53: #{tpu_custom_call.1} parent=39 // pred_check
          %p357 = pneg %p154
        $region54: #{tpu_custom_call.1} parent=39 // pred_check_branch
          %359 = sbr.rel (%p357) target = $region56
        $region55: #{tpu_custom_call.1} parent=39 // pred_region
          %361 = dma.done [#allocation9], 32768
        $region56: #{tpu_custom_call.1} parent=39 // pred_fallthru
          _
        %s362 = sand.u32 %s48, 1
        %s363 = scalar_lea.sflag [#allocation3], %s362
        %s364 = sand.u32 %s48, 1
        %s365 = smul.addr %s364, 64
        %s366 = scalar_lea.vmem [#allocation2], %s365
        %p367 = pneg %p61
        %p368 = pneg %p58
        %s369 = sand.u32 %s26, 1
        %s370 = scalar_lea.sflag [#allocation6], %s369
        %s371 = sand.u32 %s84, 1
        %s372 = smul.addr %s371, 16
        %s373 = scalar_lea.vmem [#allocation5], %s372
        %p374 = pneg %p97
        %p375 = pneg %p94
        %s376 = sand.u32 %s26, 1
        %s377 = scalar_lea.sflag [#allocation6], %s376
        %s378 = sand.u32 %s120, 1
        %s379 = smul.addr %s378, 16
        %s380 = scalar_lea.vmem [#allocation7], %s379
        %p381 = pneg %p133
        %p382 = pneg %p130
        %p383 = pneg %p154
        %p384 = pneg %p151
        %p385 = pneg %p175
        %p386 = pneg %p172
        %p387 = pneg %p203
        %p388 = pneg %p200
        %s389 = sand.u32 %s190, 1
        %s390 = scalar_lea.sflag [#allocation4], %s389
        %s391 = sand.u32 %s190, 1
        %s392 = smul.addr %s391, 256
        %s393 = scalar_lea.vmem [#allocation10], %s392
        %s394 = smul.u32 4, %s31
        %s395 = smul.u32 %s31, 4
        %s396 = ssub.s32 %s395, 1
        %p397 = scmp.gt.s32.totalorder %s396, 0
        %s398 = scalar_select %p397, %s396, 0
        %s399 = smul.u32 %s31, 4
        %s400 = sadd.s32 %s399, 4
        %p401 = scmp.lt.s32.totalorder %s400, 15
        %s402 = scalar_select %p401, %s400, 15
        %s403 = smul.u32 4, %s31
        %v404 = vld [vmem:[%s341] sm:$0xff]
        %v405 = vld [vmem:[%s341 + $0x8] sm:$0xff]
        %v406 = vld [vmem:[%s351] sm:$0xff]
        %v407 = vld [vmem:[%s351 + $0x8] sm:$0xff]
        %p408 = scmp.eq.s32.totalorder %s31, 0
        %s409 = scalar_select %p408, 1, 0
        %v410 = vstv %s409
        %vm411 = vcmp.eq.s32.totalorder %v410, 1
        %v412 = vsel %vm411, 0.0, %v404
        %v413 = vsel %vm411, 0.0, %v405
        %p414 = scmp.eq.s32.totalorder %s31, 3
        %s415 = scalar_select %p414, 1, 0
        %v416 = vstv %s415
        %vm417 = vcmp.eq.s32.totalorder %v416, 1
        %v418 = vsel %vm417, 0.0, %v406
        %v419 = vsel %vm417, 0.0, %v407
        %v420 = vld [vmem:[%s331] sm:$0xff]
        %v421 = vld [vmem:[%s331 + $0x8] sm:$0xff]
        %v422 = vld [vmem:[%s331 + $0x10] sm:$0xff]
        %v423 = vld [vmem:[%s331 + $0x18] sm:$0xff]
        %v424 = vld [vmem:[%s331 + $0x20] sm:$0xff]
        %v425 = vld [vmem:[%s331 + $0x28] sm:$0xff]
        %v426 = vld [vmem:[%s331 + $0x30] sm:$0xff]
        %v427 = vld [vmem:[%s331 + $0x38] sm:$0xff]
        %vm440 = vcmask 1040384
        %v441 = vrot.slane %v412, 7
        %v442 = vrot.slane %v413, 7
        %v443 = vsel %vm440, %v441, %v442
        %v444 = vrot.slane %v420, 7
        %v445 = vrot.slane %v421, 7
        %v446 = vsel %vm440, %v444, %v445
        %v447 = vrot.slane %v422, 7
        %v448 = vrot.slane %v423, 7
        %v449 = vsel %vm440, %v447, %v448
        %v450 = vrot.slane %v424, 7
        %v451 = vrot.slane %v425, 7
        %v452 = vsel %vm440, %v450, %v451
        %v453 = vrot.slane %v426, 7
        %v454 = vrot.slane %v427, 7
        %v455 = vsel %vm440, %v453, %v454
        %v456 = vrot.slane %v418, 7
        %v457 = vrot.slane %v419, 7
        %v458 = vsel %vm440, %v456, %v457
        %v477 = vsel %vm440, 0.0, %v441
        %v478 = vsel %vm440, 0.0, %v444
        %v479 = vsel %vm440, 0.0, %v447
        %v480 = vsel %vm440, 0.0, %v450
        %v481 = vsel %vm440, 0.0, %v453
        %v482 = vsel %vm440, 0.0, %v456
        %v483 = vsel %vm440, %v442, 0.0
        %v484 = vsel %vm440, %v445, 0.0
        %v485 = vsel %vm440, %v448, 0.0
        %v486 = vsel %vm440, %v451, 0.0
        %v487 = vsel %vm440, %v454, 0.0
        %v488 = vsel %vm440, %v457, 0.0
        %v489 = vld [vmem:[%s4] sm:$0x1]
        %vm500 = vcmask 1046528
        %v501 = vrot.slane %v477, 1
        %v502 = vrot.slane %v443, 1
        %v503 = vsel %vm500, %v501, %v502
        %v504 = vrot.slane %v483, 1
        %v505 = vsel %vm500, %v502, %v504
        %v506 = vrot.slane %v478, 1
        %v507 = vrot.slane %v446, 1
        %v508 = vsel %vm500, %v506, %v507
        %v509 = vrot.slane %v484, 1
        %v510 = vsel %vm500, %v507, %v509
        %v511 = vrot.slane %v479, 1
        %v512 = vrot.slane %v449, 1
        %v513 = vsel %vm500, %v511, %v512
        %v514 = vrot.slane %v485, 1
        %v515 = vsel %vm500, %v512, %v514
        %v516 = vrot.slane %v480, 1
        %v517 = vrot.slane %v452, 1
        %v518 = vsel %vm500, %v516, %v517
        %v519 = vrot.slane %v486, 1
        %v520 = vsel %vm500, %v517, %v519
        %v521 = vrot.slane %v481, 1
        %v522 = vrot.slane %v455, 1
        %v523 = vsel %vm500, %v521, %v522
        %v524 = vrot.slane %v487, 1
        %v525 = vsel %vm500, %v522, %v524
        %v538 = vrot.slane %v482, 1
        %v539 = vrot.slane %v458, 1
        %v540 = vsel %vm500, %v538, %v539
        %v541 = vrot.slane %v488, 1
        %v542 = vsel %vm500, %v539, %v541
        %v545 = vld [vmem:[#allocation8] sm:$0xff]
        %v546 = vld [vmem:[#allocation8 + $0x8] sm:$0xff]
        %v547 = vld [vmem:[#allocation8 + $0x10] sm:$0xff]
        %v548 = vld [vmem:[#allocation8 + $0x18] sm:$0xff]
        %v549 = vld [vmem:[#allocation8 + $0x20] sm:$0xff]
        %v550 = vld [vmem:[#allocation8 + $0x28] sm:$0xff]
        %v551 = vld [vmem:[#allocation8 + $0x30] sm:$0xff]
        %v552 = vld [vmem:[#allocation8 + $0x38] sm:$0xff]
        %v553 = vld [vmem:[#allocation8 + $0x40] sm:$0xff]
        %v554 = vld [vmem:[#allocation8 + $0x48] sm:$0xff]
        %v555 = vld [vmem:[#allocation8 + $0x50] sm:$0xff]
        %v556 = vld [vmem:[#allocation8 + $0x58] sm:$0xff]
        %v557 = vld [vmem:[#allocation8 + $0x60] sm:$0xff]
        %v558 = vld [vmem:[#allocation8 + $0x68] sm:$0xff]
        %v559 = vld [vmem:[#allocation8 + $0x70] sm:$0xff]
        %v560 = vld [vmem:[#allocation8 + $0x78] sm:$0xff]
        %v561 = vld [vmem:[#allocation8 + $0x80] sm:$0xff]
        %v562 = vld [vmem:[#allocation8 + $0x88] sm:$0xff]
        %v563 = vld [vmem:[#allocation8 + $0x90] sm:$0xff]
        %v564 = vld [vmem:[#allocation8 + $0x98] sm:$0xff]
        %v565 = vld [vmem:[#allocation8 + $0xa0] sm:$0xff]
        %v566 = vld [vmem:[#allocation8 + $0xa8] sm:$0xff]
        %v567 = vld [vmem:[#allocation8 + $0xb0] sm:$0xff]
        %v568 = vld [vmem:[#allocation8 + $0xb8] sm:$0xff]
        %v569 = vld [vmem:[#allocation8 + $0xc0] sm:$0xff]
        %v570 = vld [vmem:[#allocation8 + $0xc8] sm:$0xff]
        %v571 = vld [vmem:[#allocation8 + $0xd0] sm:$0xff]
        %v572 = vld [vmem:[#allocation8 + $0xd8] sm:$0xff]
        %v573 = vld [vmem:[#allocation8 + $0xe0] sm:$0xff]
        %v574 = vld [vmem:[#allocation8 + $0xe8] sm:$0xff]
        %v575 = vld [vmem:[#allocation8 + $0xf0] sm:$0xff]
        %v576 = vld [vmem:[#allocation8 + $0xf8] sm:$0xff]
        %v577 = vld [vmem:[#allocation8 + $0x100] sm:$0xff]
        %v578 = vld [vmem:[#allocation8 + $0x108] sm:$0xff]
        %v579 = vld [vmem:[#allocation8 + $0x110] sm:$0xff]
        %v580 = vld [vmem:[#allocation8 + $0x118] sm:$0xff]
        %v581 = vld [vmem:[#allocation8 + $0x120] sm:$0xff]
        %v582 = vld [vmem:[#allocation8 + $0x128] sm:$0xff]
        %v583 = vld [vmem:[#allocation8 + $0x130] sm:$0xff]
        %v584 = vld [vmem:[#allocation8 + $0x138] sm:$0xff]
        %v585 = vld [vmem:[#allocation8 + $0x140] sm:$0xff]
        %v586 = vld [vmem:[#allocation8 + $0x148] sm:$0xff]
        %v587 = vld [vmem:[#allocation8 + $0x150] sm:$0xff]
        %v588 = vld [vmem:[#allocation8 + $0x158] sm:$0xff]
        %v589 = vld [vmem:[#allocation8 + $0x160] sm:$0xff]
        %v590 = vld [vmem:[#allocation8 + $0x168] sm:$0xff]
        %v591 = vld [vmem:[#allocation8 + $0x170] sm:$0xff]
        %v592 = vld [vmem:[#allocation8 + $0x178] sm:$0xff]
        %v593 = vld [vmem:[#allocation8 + $0x180] sm:$0xff]
        %v594 = vld [vmem:[#allocation8 + $0x188] sm:$0xff]
        %v595 = vld [vmem:[#allocation8 + $0x190] sm:$0xff]
        %v596 = vld [vmem:[#allocation8 + $0x198] sm:$0xff]
        %v597 = vld [vmem:[#allocation8 + $0x1a0] sm:$0xff]
        %v598 = vld [vmem:[#allocation8 + $0x1a8] sm:$0xff]
        %v599 = vld [vmem:[#allocation8 + $0x1b0] sm:$0xff]
        %v600 = vld [vmem:[#allocation8 + $0x1b8] sm:$0xff]
        %v601 = vld [vmem:[#allocation8 + $0x1c0] sm:$0xff]
        %v602 = vld [vmem:[#allocation8 + $0x1c8] sm:$0xff]
        %v603 = vld [vmem:[#allocation8 + $0x1d0] sm:$0xff]
        %v604 = vld [vmem:[#allocation8 + $0x1d8] sm:$0xff]
        %v605 = vld [vmem:[#allocation8 + $0x1e0] sm:$0xff]
        %v606 = vld [vmem:[#allocation8 + $0x1e8] sm:$0xff]
        %v607 = vld [vmem:[#allocation8 + $0x1f0] sm:$0xff]
        %v608 = vld [vmem:[#allocation8 + $0x1f8] sm:$0xff]
        %v609 = vld [vmem:[#allocation8 + $0x200] sm:$0xff]
        %v610 = vld [vmem:[#allocation8 + $0x208] sm:$0xff]
        %v611 = vld [vmem:[#allocation8 + $0x210] sm:$0xff]
        %v612 = vld [vmem:[#allocation8 + $0x218] sm:$0xff]
        %v613 = vld [vmem:[#allocation8 + $0x220] sm:$0xff]
        %v614 = vld [vmem:[#allocation8 + $0x228] sm:$0xff]
        %v615 = vld [vmem:[#allocation8 + $0x230] sm:$0xff]
        %v616 = vld [vmem:[#allocation8 + $0x238] sm:$0xff]
        %v617 = vld [vmem:[#allocation8 + $0x240] sm:$0xff]
        %v618 = vld [vmem:[#allocation8 + $0x248] sm:$0xff]
        %v619 = vld [vmem:[#allocation8 + $0x250] sm:$0xff]
        %v620 = vld [vmem:[#allocation8 + $0x258] sm:$0xff]
        %v621 = vld [vmem:[#allocation8 + $0x260] sm:$0xff]
        %v622 = vld [vmem:[#allocation8 + $0x268] sm:$0xff]
        %v623 = vld [vmem:[#allocation8 + $0x270] sm:$0xff]
        %v624 = vld [vmem:[#allocation8 + $0x278] sm:$0xff]
        %v625 = vld [vmem:[#allocation8 + $0x280] sm:$0xff]
        %v626 = vld [vmem:[#allocation8 + $0x288] sm:$0xff]
        %v627 = vld [vmem:[#allocation8 + $0x290] sm:$0xff]
        %v628 = vld [vmem:[#allocation8 + $0x298] sm:$0xff]
        %v629 = vld [vmem:[#allocation8 + $0x2a0] sm:$0xff]
        %v630 = vld [vmem:[#allocation8 + $0x2a8] sm:$0xff]
        %v631 = vld [vmem:[#allocation8 + $0x2b0] sm:$0xff]
        %v632 = vld [vmem:[#allocation8 + $0x2b8] sm:$0xff]
        %v633 = vld [vmem:[#allocation8 + $0x2c0] sm:$0xff]
        %v634 = vld [vmem:[#allocation8 + $0x2c8] sm:$0xff]
        %v635 = vld [vmem:[#allocation8 + $0x2d0] sm:$0xff]
        %v636 = vld [vmem:[#allocation8 + $0x2d8] sm:$0xff]
        %v637 = vld [vmem:[#allocation8 + $0x2e0] sm:$0xff]
        %v638 = vld [vmem:[#allocation8 + $0x2e8] sm:$0xff]
        %v639 = vld [vmem:[#allocation8 + $0x2f0] sm:$0xff]
        %v640 = vld [vmem:[#allocation8 + $0x2f8] sm:$0xff]
        %v641 = vld [vmem:[#allocation8 + $0x300] sm:$0xff]
        %v642 = vld [vmem:[#allocation8 + $0x308] sm:$0xff]
        %v643 = vld [vmem:[#allocation8 + $0x310] sm:$0xff]
        %v644 = vld [vmem:[#allocation8 + $0x318] sm:$0xff]
        %v645 = vld [vmem:[#allocation8 + $0x320] sm:$0xff]
        %v646 = vld [vmem:[#allocation8 + $0x328] sm:$0xff]
        %v647 = vld [vmem:[#allocation8 + $0x330] sm:$0xff]
        %v648 = vld [vmem:[#allocation8 + $0x338] sm:$0xff]
        %v649 = vld [vmem:[#allocation8 + $0x340] sm:$0xff]
        %v650 = vld [vmem:[#allocation8 + $0x348] sm:$0xff]
        %v651 = vld [vmem:[#allocation8 + $0x350] sm:$0xff]
        %v652 = vld [vmem:[#allocation8 + $0x358] sm:$0xff]
        %v653 = vld [vmem:[#allocation8 + $0x360] sm:$0xff]
        %v654 = vld [vmem:[#allocation8 + $0x368] sm:$0xff]
        %v655 = vld [vmem:[#allocation8 + $0x370] sm:$0xff]
        %v656 = vld [vmem:[#allocation8 + $0x378] sm:$0xff]
        %v657 = vld [vmem:[#allocation8 + $0x380] sm:$0xff]
        %v658 = vld [vmem:[#allocation8 + $0x388] sm:$0xff]
        %v659 = vld [vmem:[#allocation8 + $0x390] sm:$0xff]
        %v660 = vld [vmem:[#allocation8 + $0x398] sm:$0xff]
        %v661 = vld [vmem:[#allocation8 + $0x3a0] sm:$0xff]
        %v662 = vld [vmem:[#allocation8 + $0x3a8] sm:$0xff]
        %v663 = vld [vmem:[#allocation8 + $0x3b0] sm:$0xff]
        %v664 = vld [vmem:[#allocation8 + $0x3b8] sm:$0xff]
        %v665 = vld [vmem:[#allocation8 + $0x3c0] sm:$0xff]
        %v666 = vld [vmem:[#allocation8 + $0x3c8] sm:$0xff]
        %v667 = vld [vmem:[#allocation8 + $0x3d0] sm:$0xff]
        %v668 = vld [vmem:[#allocation8 + $0x3d8] sm:$0xff]
        %v669 = vld [vmem:[#allocation8 + $0x3e0] sm:$0xff]
        %v670 = vld [vmem:[#allocation8 + $0x3e8] sm:$0xff]
        %v671 = vld [vmem:[#allocation8 + $0x3f0] sm:$0xff]
        %v672 = vld [vmem:[#allocation8 + $0x3f8] sm:$0xff]
        %673 = vmatpush.msra.mxu0 %v575
        %674 = vmatpush.msra.mxu0 %v573
        %675 = vmatpush.msra.mxu0 %v571
        %676 = vmatpush.msra.mxu0 %v569
        %677 = vmatpush.msra.mxu0 %v567
        %678 = vmatpush.msra.mxu0 %v565
        %679 = vmatpush.msra.mxu0 %v563
        %680 = vmatpush.msra.mxu0 %v561
        %681 = vmatpush.msra.mxu0 %v559
        %682 = vmatpush.msra.mxu0 %v557
        %683 = vmatpush.msra.mxu0 %v555
        %684 = vmatpush.msra.mxu0 %v553
        %685 = vmatpush.msra.mxu0 %v551
        %686 = vmatpush.msra.mxu0 %v549
        %687 = vmatpush.msra.mxu0 %v547
        %688 = vmatpush.msra.mxu0 %v545
        %689 = vmatmul.f32.gmra.mxu0 %v477
        %v690 = vpop.f32.mrf.mxu0
        %v691 = vadd.f32 0.0, %v690
        %692 = vmatmul.f32.gmra.mxu0 %v443
        %v693 = vpop.f32.mrf.mxu0
        %v694 = vadd.f32 0.0, %v693
        %695 = vmatmul.f32.gmra.mxu0 %v478
        %v696 = vpop.f32.mrf.mxu0
        %v697 = vadd.f32 0.0, %v696
        %698 = vmatmul.f32.gmra.mxu0 %v446
        %v699 = vpop.f32.mrf.mxu0
        %v700 = vadd.f32 0.0, %v699
        %701 = vmatmul.f32.gmra.mxu0 %v479
        %v702 = vpop.f32.mrf.mxu0
        %v703 = vadd.f32 0.0, %v702
        %704 = vmatmul.f32.gmra.mxu0 %v449
        %v705 = vpop.f32.mrf.mxu0
        %v706 = vadd.f32 0.0, %v705
        %707 = vmatmul.f32.gmra.mxu0 %v480
        %v708 = vpop.f32.mrf.mxu0
        %v709 = vadd.f32 0.0, %v708
        %710 = vmatmul.f32.gmra.mxu0 %v452
        %v711 = vpop.f32.mrf.mxu0
        %v712 = vadd.f32 0.0, %v711
        %713 = vmatmul.f32.gmra.mxu0 %v481
        %v714 = vpop.f32.mrf.mxu0
        %715 = vmatmul.f32.gmra.mxu0 %v455
        %v716 = vpop.f32.mrf.mxu0
        %717 = vdwg.mxu0
        %718 = vmatpush.msra.mxu0 %v607
        %719 = vmatpush.msra.mxu0 %v605
        %720 = vmatpush.msra.mxu0 %v603
        %721 = vmatpush.msra.mxu0 %v601
        %722 = vmatpush.msra.mxu0 %v599
        %723 = vmatpush.msra.mxu0 %v597
        %724 = vmatpush.msra.mxu0 %v595
        %725 = vmatpush.msra.mxu0 %v593
        %726 = vmatpush.msra.mxu0 %v591
        %727 = vmatpush.msra.mxu0 %v589
        %728 = vmatpush.msra.mxu0 %v587
        %729 = vmatpush.msra.mxu0 %v585
        %730 = vmatpush.msra.mxu0 %v583
        %731 = vmatpush.msra.mxu0 %v581
        %732 = vmatpush.msra.mxu0 %v579
        %733 = vmatpush.msra.mxu0 %v577
        %734 = vmatmul.f32.gmra.mxu0 %v503
        %v735 = vpop.f32.mrf.mxu0
        %v736 = vadd.f32 %v691, %v735
        %737 = vmatmul.f32.gmra.mxu0 %v505
        %v738 = vpop.f32.mrf.mxu0
        %v739 = vadd.f32 %v694, %v738
        %740 = vmatmul.f32.gmra.mxu0 %v508
        %v741 = vpop.f32.mrf.mxu0
        %v742 = vadd.f32 %v697, %v741
        %743 = vmatmul.f32.gmra.mxu0 %v510
        %v744 = vpop.f32.mrf.mxu0
        %v745 = vadd.f32 %v700, %v744
        %746 = vmatmul.f32.gmra.mxu0 %v513
        %v747 = vpop.f32.mrf.mxu0
        %v748 = vadd.f32 %v703, %v747
        %749 = vmatmul.f32.gmra.mxu0 %v515
        %v750 = vpop.f32.mrf.mxu0
        %v751 = vadd.f32 %v706, %v750
        %752 = vmatmul.f32.gmra.mxu0 %v518
        %v753 = vpop.f32.mrf.mxu0
        %v754 = vadd.f32 %v709, %v753
        %755 = vmatmul.f32.gmra.mxu0 %v520
        %v756 = vpop.f32.mrf.mxu0
        %v757 = vadd.f32 %v712, %v756
        %758 = vmatmul.f32.gmra.mxu0 %v523
        %v759 = vpop.f32.mrf.mxu0
        %760 = vmatmul.f32.gmra.mxu0 %v525
        %v761 = vpop.f32.mrf.mxu0
        %762 = vdwg.mxu0
        %763 = vmatpush.msra.mxu0 %v639
        %764 = vmatpush.msra.mxu0 %v637
        %765 = vmatpush.msra.mxu0 %v635
        %766 = vmatpush.msra.mxu0 %v633
        %767 = vmatpush.msra.mxu0 %v631
        %768 = vmatpush.msra.mxu0 %v629
        %769 = vmatpush.msra.mxu0 %v627
        %770 = vmatpush.msra.mxu0 %v625
        %771 = vmatpush.msra.mxu0 %v623
        %772 = vmatpush.msra.mxu0 %v621
        %773 = vmatpush.msra.mxu0 %v619
        %774 = vmatpush.msra.mxu0 %v617
        %775 = vmatpush.msra.mxu0 %v615
        %776 = vmatpush.msra.mxu0 %v613
        %777 = vmatpush.msra.mxu0 %v611
        %778 = vmatpush.msra.mxu0 %v609
        %779 = vmatmul.f32.gmra.mxu0 %v478
        %v780 = vpop.f32.mrf.mxu0
        %v781 = vadd.f32 %v736, %v780
        %782 = vmatmul.f32.gmra.mxu0 %v446
        %v783 = vpop.f32.mrf.mxu0
        %v784 = vadd.f32 %v739, %v783
        %785 = vmatmul.f32.gmra.mxu0 %v479
        %v786 = vpop.f32.mrf.mxu0
        %v787 = vadd.f32 %v742, %v786
        %788 = vmatmul.f32.gmra.mxu0 %v449
        %v789 = vpop.f32.mrf.mxu0
        %v790 = vadd.f32 %v745, %v789
        %791 = vmatmul.f32.gmra.mxu0 %v480
        %v792 = vpop.f32.mrf.mxu0
        %v793 = vadd.f32 %v748, %v792
        %794 = vmatmul.f32.gmra.mxu0 %v452
        %v795 = vpop.f32.mrf.mxu0
        %v796 = vadd.f32 %v751, %v795
        %797 = vmatmul.f32.gmra.mxu0 %v481
        %v798 = vpop.f32.mrf.mxu0
        %v799 = vadd.f32 %v754, %v798
        %800 = vmatmul.f32.gmra.mxu0 %v455
        %v801 = vpop.f32.mrf.mxu0
        %v802 = vadd.f32 %v757, %v801
        %803 = vmatmul.f32.gmra.mxu0 %v482
        %v804 = vpop.f32.mrf.mxu0
        %805 = vmatmul.f32.gmra.mxu0 %v458
        %v806 = vpop.f32.mrf.mxu0
        %807 = vdwg.mxu0
        %808 = vmatpush.msra.mxu0 %v671
        %809 = vmatpush.msra.mxu0 %v669
        %810 = vmatpush.msra.mxu0 %v667
        %811 = vmatpush.msra.mxu0 %v665
        %812 = vmatpush.msra.mxu0 %v663
        %813 = vmatpush.msra.mxu0 %v661
        %814 = vmatpush.msra.mxu0 %v659
        %815 = vmatpush.msra.mxu0 %v657
        %816 = vmatpush.msra.mxu0 %v655
        %817 = vmatpush.msra.mxu0 %v653
        %818 = vmatpush.msra.mxu0 %v651
        %819 = vmatpush.msra.mxu0 %v649
        %820 = vmatpush.msra.mxu0 %v647
        %821 = vmatpush.msra.mxu0 %v645
        %822 = vmatpush.msra.mxu0 %v643
        %823 = vmatpush.msra.mxu0 %v641
        %824 = vmatmul.f32.gmra.mxu0 %v508
        %v825 = vpop.f32.mrf.mxu0
        %v826 = vadd.f32 %v781, %v825
        %827 = vmatmul.f32.gmra.mxu0 %v510
        %v828 = vpop.f32.mrf.mxu0
        %v829 = vadd.f32 %v784, %v828
        %830 = vmatmul.f32.gmra.mxu0 %v513
        %v831 = vpop.f32.mrf.mxu0
        %v832 = vadd.f32 %v787, %v831
        %833 = vmatmul.f32.gmra.mxu0 %v515
        %v834 = vpop.f32.mrf.mxu0
        %v835 = vadd.f32 %v790, %v834
        %836 = vmatmul.f32.gmra.mxu0 %v518
        %v837 = vpop.f32.mrf.mxu0
        %v838 = vadd.f32 %v793, %v837
        %839 = vmatmul.f32.gmra.mxu0 %v520
        %v840 = vpop.f32.mrf.mxu0
        %v841 = vadd.f32 %v796, %v840
        %842 = vmatmul.f32.gmra.mxu0 %v523
        %v843 = vpop.f32.mrf.mxu0
        %v844 = vadd.f32 %v799, %v843
        %845 = vmatmul.f32.gmra.mxu0 %v525
        %v846 = vpop.f32.mrf.mxu0
        %v847 = vadd.f32 %v802, %v846
        %848 = vmatmul.f32.gmra.mxu0 %v540
        %v849 = vpop.f32.mrf.mxu0
        %850 = vmatmul.f32.gmra.mxu0 %v542
        %v851 = vpop.f32.mrf.mxu0
        %852 = vdwg.mxu0
        %853 = vmatpush.msra.mxu0 %v576
        %854 = vmatpush.msra.mxu0 %v574
        %855 = vmatpush.msra.mxu0 %v572
        %856 = vmatpush.msra.mxu0 %v570
        %857 = vmatpush.msra.mxu0 %v568
        %858 = vmatpush.msra.mxu0 %v566
        %859 = vmatpush.msra.mxu0 %v564
        %860 = vmatpush.msra.mxu0 %v562
        %861 = vmatpush.msra.mxu0 %v560
        %862 = vmatpush.msra.mxu0 %v558
        %863 = vmatpush.msra.mxu0 %v556
        %864 = vmatpush.msra.mxu0 %v554
        %865 = vmatpush.msra.mxu0 %v552
        %866 = vmatpush.msra.mxu0 %v550
        %867 = vmatpush.msra.mxu0 %v548
        %868 = vmatpush.msra.mxu0 %v546
        %869 = vmatmul.f32.gmra.mxu0 %v477
        %v870 = vpop.f32.mrf.mxu0
        %871 = vmatmul.f32.gmra.mxu0 %v443
        %v872 = vpop.f32.mrf.mxu0
        %873 = vmatmul.f32.gmra.mxu0 %v478
        %v874 = vpop.f32.mrf.mxu0
        %v875 = vadd.f32 0.0, %v874
        %876 = vmatmul.f32.gmra.mxu0 %v446
        %v877 = vpop.f32.mrf.mxu0
        %v878 = vadd.f32 0.0, %v877
        %879 = vmatmul.f32.gmra.mxu0 %v479
        %v880 = vpop.f32.mrf.mxu0
        %v881 = vadd.f32 0.0, %v880
        %882 = vmatmul.f32.gmra.mxu0 %v449
        %v883 = vpop.f32.mrf.mxu0
        %v884 = vadd.f32 0.0, %v883
        %885 = vmatmul.f32.gmra.mxu0 %v480
        %v886 = vpop.f32.mrf.mxu0
        %v887 = vadd.f32 0.0, %v886
        %888 = vmatmul.f32.gmra.mxu0 %v452
        %v889 = vpop.f32.mrf.mxu0
        %v890 = vadd.f32 0.0, %v889
        %891 = vmatmul.f32.gmra.mxu0 %v481
        %v892 = vpop.f32.mrf.mxu0
        %v893 = vadd.f32 0.0, %v892
        %894 = vmatmul.f32.gmra.mxu0 %v455
        %v895 = vpop.f32.mrf.mxu0
        %v896 = vadd.f32 0.0, %v895
        %897 = vdwg.mxu0
        %898 = vmatpush.msra.mxu0 %v608
        %899 = vmatpush.msra.mxu0 %v606
        %900 = vmatpush.msra.mxu0 %v604
        %901 = vmatpush.msra.mxu0 %v602
        %902 = vmatpush.msra.mxu0 %v600
        %903 = vmatpush.msra.mxu0 %v598
        %904 = vmatpush.msra.mxu0 %v596
        %905 = vmatpush.msra.mxu0 %v594
        %906 = vmatpush.msra.mxu0 %v592
        %907 = vmatpush.msra.mxu0 %v590
        %908 = vmatpush.msra.mxu0 %v588
        %909 = vmatpush.msra.mxu0 %v586
        %910 = vmatpush.msra.mxu0 %v584
        %911 = vmatpush.msra.mxu0 %v582
        %912 = vmatpush.msra.mxu0 %v580
        %913 = vmatpush.msra.mxu0 %v578
        %914 = vmatmul.f32.gmra.mxu0 %v503
        %v915 = vpop.f32.mrf.mxu0
        %916 = vmatmul.f32.gmra.mxu0 %v505
        %v917 = vpop.f32.mrf.mxu0
        %918 = vmatmul.f32.gmra.mxu0 %v508
        %v919 = vpop.f32.mrf.mxu0
        %v920 = vadd.f32 %v875, %v919
        %921 = vmatmul.f32.gmra.mxu0 %v510
        %v922 = vpop.f32.mrf.mxu0
        %v923 = vadd.f32 %v878, %v922
        %924 = vmatmul.f32.gmra.mxu0 %v513
        %v925 = vpop.f32.mrf.mxu0
        %v926 = vadd.f32 %v881, %v925
        %927 = vmatmul.f32.gmra.mxu0 %v515
        %v928 = vpop.f32.mrf.mxu0
        %v929 = vadd.f32 %v884, %v928
        %930 = vmatmul.f32.gmra.mxu0 %v518
        %v931 = vpop.f32.mrf.mxu0
        %v932 = vadd.f32 %v887, %v931
        %933 = vmatmul.f32.gmra.mxu0 %v520
        %v934 = vpop.f32.mrf.mxu0
        %v935 = vadd.f32 %v890, %v934
        %936 = vmatmul.f32.gmra.mxu0 %v523
        %v937 = vpop.f32.mrf.mxu0
        %v938 = vadd.f32 %v893, %v937
        %939 = vmatmul.f32.gmra.mxu0 %v525
        %v940 = vpop.f32.mrf.mxu0
        %v941 = vadd.f32 %v896, %v940
        %942 = vdwg.mxu0
        %943 = vmatpush.msra.mxu0 %v640
        %944 = vmatpush.msra.mxu0 %v638
        %945 = vmatpush.msra.mxu0 %v636
        %946 = vmatpush.msra.mxu0 %v634
        %947 = vmatpush.msra.mxu0 %v632
        %948 = vmatpush.msra.mxu0 %v630
        %949 = vmatpush.msra.mxu0 %v628
        %950 = vmatpush.msra.mxu0 %v626
        %951 = vmatpush.msra.mxu0 %v624
        %952 = vmatpush.msra.mxu0 %v622
        %953 = vmatpush.msra.mxu0 %v620
        %954 = vmatpush.msra.mxu0 %v618
        %955 = vmatpush.msra.mxu0 %v616
        %956 = vmatpush.msra.mxu0 %v614
        %957 = vmatpush.msra.mxu0 %v612
        %958 = vmatpush.msra.mxu0 %v610
        %959 = vmatmul.f32.gmra.mxu0 %v478
        %v960 = vpop.f32.mrf.mxu0
        %961 = vmatmul.f32.gmra.mxu0 %v446
        %v962 = vpop.f32.mrf.mxu0
        %963 = vmatmul.f32.gmra.mxu0 %v479
        %v964 = vpop.f32.mrf.mxu0
        %v965 = vadd.f32 %v920, %v964
        %966 = vmatmul.f32.gmra.mxu0 %v449
        %v967 = vpop.f32.mrf.mxu0
        %v968 = vadd.f32 %v923, %v967
        %969 = vmatmul.f32.gmra.mxu0 %v480
        %v970 = vpop.f32.mrf.mxu0
        %v971 = vadd.f32 %v926, %v970
        %972 = vmatmul.f32.gmra.mxu0 %v452
        %v973 = vpop.f32.mrf.mxu0
        %v974 = vadd.f32 %v929, %v973
        %975 = vmatmul.f32.gmra.mxu0 %v481
        %v976 = vpop.f32.mrf.mxu0
        %v977 = vadd.f32 %v932, %v976
        %978 = vmatmul.f32.gmra.mxu0 %v455
        %v979 = vpop.f32.mrf.mxu0
        %v980 = vadd.f32 %v935, %v979
        %981 = vmatmul.f32.gmra.mxu0 %v482
        %v982 = vpop.f32.mrf.mxu0
        %v983 = vadd.f32 %v938, %v982
        %984 = vmatmul.f32.gmra.mxu0 %v458
        %v985 = vpop.f32.mrf.mxu0
        %v986 = vadd.f32 %v941, %v985
        %987 = vdwg.mxu0
        %988 = vmatpush.msra.mxu0 %v672
        %989 = vmatpush.msra.mxu0 %v670
        %990 = vmatpush.msra.mxu0 %v668
        %991 = vmatpush.msra.mxu0 %v666
        %992 = vmatpush.msra.mxu0 %v664
        %993 = vmatpush.msra.mxu0 %v662
        %994 = vmatpush.msra.mxu0 %v660
        %995 = vmatpush.msra.mxu0 %v658
        %996 = vmatpush.msra.mxu0 %v656
        %997 = vmatpush.msra.mxu0 %v654
        %998 = vmatpush.msra.mxu0 %v652
        %999 = vmatpush.msra.mxu0 %v650
        %1000 = vmatpush.msra.mxu0 %v648
        %1001 = vmatpush.msra.mxu0 %v646
        %1002 = vmatpush.msra.mxu0 %v644
        %1003 = vmatpush.msra.mxu0 %v642
        %1004 = vmatmul.f32.gmra.mxu0 %v508
        %v1005 = vpop.f32.mrf.mxu0
        %1006 = vmatmul.f32.gmra.mxu0 %v510
        %v1007 = vpop.f32.mrf.mxu0
        %1008 = vmatmul.f32.gmra.mxu0 %v513
        %v1009 = vpop.f32.mrf.mxu0
        %v1010 = vadd.f32 %v965, %v1009
        %1011 = vmatmul.f32.gmra.mxu0 %v515
        %v1012 = vpop.f32.mrf.mxu0
        %v1013 = vadd.f32 %v968, %v1012
        %1014 = vmatmul.f32.gmra.mxu0 %v518
        %v1015 = vpop.f32.mrf.mxu0
        %v1016 = vadd.f32 %v971, %v1015
        %1017 = vmatmul.f32.gmra.mxu0 %v520
        %v1018 = vpop.f32.mrf.mxu0
        %v1019 = vadd.f32 %v974, %v1018
        %1020 = vmatmul.f32.gmra.mxu0 %v523
        %v1021 = vpop.f32.mrf.mxu0
        %v1022 = vadd.f32 %v977, %v1021
        %1023 = vmatmul.f32.gmra.mxu0 %v525
        %v1024 = vpop.f32.mrf.mxu0
        %v1025 = vadd.f32 %v980, %v1024
        %1026 = vmatmul.f32.gmra.mxu0 %v540
        %v1027 = vpop.f32.mrf.mxu0
        %v1028 = vadd.f32 %v983, %v1027
        %1029 = vmatmul.f32.gmra.mxu0 %v542
        %v1030 = vpop.f32.mrf.mxu0
        %v1031 = vadd.f32 %v986, %v1030
        %1032 = vdwg.mxu0
        %v1034 = vperm.slane %v489, 0
        %v1036 = vadd.f32 %v826, %v1034
        %v1037 = vadd.f32 %v829, %v1034
        %v1038 = vadd.f32 %v832, %v1034
        %v1039 = vadd.f32 %v835, %v1034
        %v1040 = vadd.f32 %v838, %v1034
        %v1041 = vadd.f32 %v841, %v1034
        %v1042 = vadd.f32 %v844, %v1034
        %v1043 = vadd.f32 %v847, %v1034
        %1044 = vst [vmem:[%s393] sm:$0xff] %v1036
        %1045 = vst [vmem:[%s393 + $0x8] sm:$0xff] %v1037
        %1046 = vst [vmem:[%s393 + $0x10] sm:$0xff] %v1038
        %1047 = vst [vmem:[%s393 + $0x18] sm:$0xff] %v1039
        %1048 = vst [vmem:[%s393 + $0x20] sm:$0xff] %v1040
        %1049 = vst [vmem:[%s393 + $0x28] sm:$0xff] %v1041
        %1050 = vst [vmem:[%s393 + $0x30] sm:$0xff] %v1042
        %1051 = vst [vmem:[%s393 + $0x38] sm:$0xff] %v1043
        %v1052 = vadd.f32 %v1010, %v1034
        %v1053 = vadd.f32 %v1013, %v1034
        %v1054 = vadd.f32 %v1016, %v1034
        %v1055 = vadd.f32 %v1019, %v1034
        %v1056 = vadd.f32 %v1022, %v1034
        %v1057 = vadd.f32 %v1025, %v1034
        %v1058 = vadd.f32 %v1028, %v1034
        %v1059 = vadd.f32 %v1031, %v1034
        %s1060 = scalar_lea.vmem %s393, 128 [#allocation10]
        %1061 = vst [vmem:[%s1060] sm:$0xff] %v1052
        %1062 = vst [vmem:[%s1060 + $0x8] sm:$0xff] %v1053
        %1063 = vst [vmem:[%s1060 + $0x10] sm:$0xff] %v1054
        %1064 = vst [vmem:[%s1060 + $0x18] sm:$0xff] %v1055
        %1065 = vst [vmem:[%s1060 + $0x20] sm:$0xff] %v1056
        %1066 = vst [vmem:[%s1060 + $0x28] sm:$0xff] %v1057
        %1067 = vst [vmem:[%s1060 + $0x30] sm:$0xff] %v1058
        %1068 = vst [vmem:[%s1060 + $0x38] sm:$0xff] %v1059
        %v1069 = vrot.slane %v503, 1
        %v1070 = vrot.slane %v505, 1
        %v1071 = vsel %vm500, %v1069, %v1070
        %v1072 = vrot.slane %v508, 1
        %v1073 = vrot.slane %v510, 1
        %v1074 = vsel %vm500, %v1072, %v1073
        %v1075 = vrot.slane %v504, 1
        %v1076 = vsel %vm500, %v1070, %v1075
        %v1077 = vrot.slane %v509, 1
        %v1078 = vsel %vm500, %v1073, %v1077
        %v1079 = vrot.slane %v513, 1
        %v1080 = vrot.slane %v515, 1
        %v1081 = vsel %vm500, %v1079, %v1080
        %v1082 = vrot.slane %v514, 1
        %v1083 = vsel %vm500, %v1080, %v1082
        %v1084 = vrot.slane %v518, 1
        %v1085 = vrot.slane %v520, 1
        %v1086 = vsel %vm500, %v1084, %v1085
        %v1087 = vrot.slane %v519, 1
        %v1088 = vsel %vm500, %v1085, %v1087
        %v1089 = vrot.slane %v523, 1
        %v1090 = vrot.slane %v525, 1
        %v1091 = vsel %vm500, %v1089, %v1090
        %v1092 = vrot.slane %v524, 1
        %v1093 = vsel %vm500, %v1090, %v1092
        %v1094 = vrot.slane %v540, 1
        %v1095 = vrot.slane %v542, 1
        %v1096 = vsel %vm500, %v1094, %v1095
        %v1097 = vrot.slane %v541, 1
        %v1098 = vsel %vm500, %v1095, %v1097
        %s1111 = scalar_lea.vmem [#allocation8], 1024
        %v1112 = vld [vmem:[%s1111] sm:$0xff]
        %v1113 = vld [vmem:[%s1111 + $0x8] sm:$0xff]
        %v1114 = vld [vmem:[%s1111 + $0x10] sm:$0xff]
        %v1115 = vld [vmem:[%s1111 + $0x18] sm:$0xff]
        %v1116 = vld [vmem:[%s1111 + $0x20] sm:$0xff]
        %v1117 = vld [vmem:[%s1111 + $0x28] sm:$0xff]
        %v1118 = vld [vmem:[%s1111 + $0x30] sm:$0xff]
        %v1119 = vld [vmem:[%s1111 + $0x38] sm:$0xff]
        %v1120 = vld [vmem:[%s1111 + $0x40] sm:$0xff]
        %v1121 = vld [vmem:[%s1111 + $0x48] sm:$0xff]
        %v1122 = vld [vmem:[%s1111 + $0x50] sm:$0xff]
        %v1123 = vld [vmem:[%s1111 + $0x58] sm:$0xff]
        %v1124 = vld [vmem:[%s1111 + $0x60] sm:$0xff]
        %v1125 = vld [vmem:[%s1111 + $0x68] sm:$0xff]
        %v1126 = vld [vmem:[%s1111 + $0x70] sm:$0xff]
        %v1127 = vld [vmem:[%s1111 + $0x78] sm:$0xff]
        %v1128 = vld [vmem:[%s1111 + $0x80] sm:$0xff]
        %v1129 = vld [vmem:[%s1111 + $0x88] sm:$0xff]
        %v1130 = vld [vmem:[%s1111 + $0x90] sm:$0xff]
        %v1131 = vld [vmem:[%s1111 + $0x98] sm:$0xff]
        %v1132 = vld [vmem:[%s1111 + $0xa0] sm:$0xff]
        %v1133 = vld [vmem:[%s1111 + $0xa8] sm:$0xff]
        %v1134 = vld [vmem:[%s1111 + $0xb0] sm:$0xff]
        %v1135 = vld [vmem:[%s1111 + $0xb8] sm:$0xff]
        %v1136 = vld [vmem:[%s1111 + $0xc0] sm:$0xff]
        %v1137 = vld [vmem:[%s1111 + $0xc8] sm:$0xff]
        %v1138 = vld [vmem:[%s1111 + $0xd0] sm:$0xff]
        %v1139 = vld [vmem:[%s1111 + $0xd8] sm:$0xff]
        %v1140 = vld [vmem:[%s1111 + $0xe0] sm:$0xff]
        %v1141 = vld [vmem:[%s1111 + $0xe8] sm:$0xff]
        %v1142 = vld [vmem:[%s1111 + $0xf0] sm:$0xff]
        %v1143 = vld [vmem:[%s1111 + $0xf8] sm:$0xff]
        %v1144 = vld [vmem:[%s1111 + $0x100] sm:$0xff]
        %v1145 = vld [vmem:[%s1111 + $0x108] sm:$0xff]
        %v1146 = vld [vmem:[%s1111 + $0x110] sm:$0xff]
        %v1147 = vld [vmem:[%s1111 + $0x118] sm:$0xff]
        %v1148 = vld [vmem:[%s1111 + $0x120] sm:$0xff]
        %v1149 = vld [vmem:[%s1111 + $0x128] sm:$0xff]
        %v1150 = vld [vmem:[%s1111 + $0x130] sm:$0xff]
        %v1151 = vld [vmem:[%s1111 + $0x138] sm:$0xff]
        %v1152 = vld [vmem:[%s1111 + $0x140] sm:$0xff]
        %v1153 = vld [vmem:[%s1111 + $0x148] sm:$0xff]
        %v1154 = vld [vmem:[%s1111 + $0x150] sm:$0xff]
        %v1155 = vld [vmem:[%s1111 + $0x158] sm:$0xff]
        %v1156 = vld [vmem:[%s1111 + $0x160] sm:$0xff]
        %v1157 = vld [vmem:[%s1111 + $0x168] sm:$0xff]
        %v1158 = vld [vmem:[%s1111 + $0x170] sm:$0xff]
        %v1159 = vld [vmem:[%s1111 + $0x178] sm:$0xff]
        %v1160 = vld [vmem:[%s1111 + $0x180] sm:$0xff]
        %v1161 = vld [vmem:[%s1111 + $0x188] sm:$0xff]
        %v1162 = vld [vmem:[%s1111 + $0x190] sm:$0xff]
        %v1163 = vld [vmem:[%s1111 + $0x198] sm:$0xff]
        %v1164 = vld [vmem:[%s1111 + $0x1a0] sm:$0xff]
        %v1165 = vld [vmem:[%s1111 + $0x1a8] sm:$0xff]
        %v1166 = vld [vmem:[%s1111 + $0x1b0] sm:$0xff]
        %v1167 = vld [vmem:[%s1111 + $0x1b8] sm:$0xff]
        %v1168 = vld [vmem:[%s1111 + $0x1c0] sm:$0xff]
        %v1169 = vld [vmem:[%s1111 + $0x1c8] sm:$0xff]
        %v1170 = vld [vmem:[%s1111 + $0x1d0] sm:$0xff]
        %v1171 = vld [vmem:[%s1111 + $0x1d8] sm:$0xff]
        %v1172 = vld [vmem:[%s1111 + $0x1e0] sm:$0xff]
        %v1173 = vld [vmem:[%s1111 + $0x1e8] sm:$0xff]
        %v1174 = vld [vmem:[%s1111 + $0x1f0] sm:$0xff]
        %v1175 = vld [vmem:[%s1111 + $0x1f8] sm:$0xff]
        %v1176 = vld [vmem:[%s1111 + $0x200] sm:$0xff]
        %v1177 = vld [vmem:[%s1111 + $0x208] sm:$0xff]
        %v1178 = vld [vmem:[%s1111 + $0x210] sm:$0xff]
        %v1179 = vld [vmem:[%s1111 + $0x218] sm:$0xff]
        %v1180 = vld [vmem:[%s1111 + $0x220] sm:$0xff]
        %v1181 = vld [vmem:[%s1111 + $0x228] sm:$0xff]
        %v1182 = vld [vmem:[%s1111 + $0x230] sm:$0xff]
        %v1183 = vld [vmem:[%s1111 + $0x238] sm:$0xff]
        %v1184 = vld [vmem:[%s1111 + $0x240] sm:$0xff]
        %v1185 = vld [vmem:[%s1111 + $0x248] sm:$0xff]
        %v1186 = vld [vmem:[%s1111 + $0x250] sm:$0xff]
        %v1187 = vld [vmem:[%s1111 + $0x258] sm:$0xff]
        %v1188 = vld [vmem:[%s1111 + $0x260] sm:$0xff]
        %v1189 = vld [vmem:[%s1111 + $0x268] sm:$0xff]
        %v1190 = vld [vmem:[%s1111 + $0x270] sm:$0xff]
        %v1191 = vld [vmem:[%s1111 + $0x278] sm:$0xff]
        %v1192 = vld [vmem:[%s1111 + $0x280] sm:$0xff]
        %v1193 = vld [vmem:[%s1111 + $0x288] sm:$0xff]
        %v1194 = vld [vmem:[%s1111 + $0x290] sm:$0xff]
        %v1195 = vld [vmem:[%s1111 + $0x298] sm:$0xff]
        %v1196 = vld [vmem:[%s1111 + $0x2a0] sm:$0xff]
        %v1197 = vld [vmem:[%s1111 + $0x2a8] sm:$0xff]
        %v1198 = vld [vmem:[%s1111 + $0x2b0] sm:$0xff]
        %v1199 = vld [vmem:[%s1111 + $0x2b8] sm:$0xff]
        %v1200 = vld [vmem:[%s1111 + $0x2c0] sm:$0xff]
        %v1201 = vld [vmem:[%s1111 + $0x2c8] sm:$0xff]
        %v1202 = vld [vmem:[%s1111 + $0x2d0] sm:$0xff]
        %v1203 = vld [vmem:[%s1111 + $0x2d8] sm:$0xff]
        %v1204 = vld [vmem:[%s1111 + $0x2e0] sm:$0xff]
        %v1205 = vld [vmem:[%s1111 + $0x2e8] sm:$0xff]
        %v1206 = vld [vmem:[%s1111 + $0x2f0] sm:$0xff]
        %v1207 = vld [vmem:[%s1111 + $0x2f8] sm:$0xff]
        %v1208 = vld [vmem:[%s1111 + $0x300] sm:$0xff]
        %v1209 = vld [vmem:[%s1111 + $0x308] sm:$0xff]
        %v1210 = vld [vmem:[%s1111 + $0x310] sm:$0xff]
        %v1211 = vld [vmem:[%s1111 + $0x318] sm:$0xff]
        %v1212 = vld [vmem:[%s1111 + $0x320] sm:$0xff]
        %v1213 = vld [vmem:[%s1111 + $0x328] sm:$0xff]
        %v1214 = vld [vmem:[%s1111 + $0x330] sm:$0xff]
        %v1215 = vld [vmem:[%s1111 + $0x338] sm:$0xff]
        %v1216 = vld [vmem:[%s1111 + $0x340] sm:$0xff]
        %v1217 = vld [vmem:[%s1111 + $0x348] sm:$0xff]
        %v1218 = vld [vmem:[%s1111 + $0x350] sm:$0xff]
        %v1219 = vld [vmem:[%s1111 + $0x358] sm:$0xff]
        %v1220 = vld [vmem:[%s1111 + $0x360] sm:$0xff]
        %v1221 = vld [vmem:[%s1111 + $0x368] sm:$0xff]
        %v1222 = vld [vmem:[%s1111 + $0x370] sm:$0xff]
        %v1223 = vld [vmem:[%s1111 + $0x378] sm:$0xff]
        %v1224 = vld [vmem:[%s1111 + $0x380] sm:$0xff]
        %v1225 = vld [vmem:[%s1111 + $0x388] sm:$0xff]
        %v1226 = vld [vmem:[%s1111 + $0x390] sm:$0xff]
        %v1227 = vld [vmem:[%s1111 + $0x398] sm:$0xff]
        %v1228 = vld [vmem:[%s1111 + $0x3a0] sm:$0xff]
        %v1229 = vld [vmem:[%s1111 + $0x3a8] sm:$0xff]
        %v1230 = vld [vmem:[%s1111 + $0x3b0] sm:$0xff]
        %v1231 = vld [vmem:[%s1111 + $0x3b8] sm:$0xff]
        %v1232 = vld [vmem:[%s1111 + $0x3c0] sm:$0xff]
        %v1233 = vld [vmem:[%s1111 + $0x3c8] sm:$0xff]
        %v1234 = vld [vmem:[%s1111 + $0x3d0] sm:$0xff]
        %v1235 = vld [vmem:[%s1111 + $0x3d8] sm:$0xff]
        %v1236 = vld [vmem:[%s1111 + $0x3e0] sm:$0xff]
        %v1237 = vld [vmem:[%s1111 + $0x3e8] sm:$0xff]
        %v1238 = vld [vmem:[%s1111 + $0x3f0] sm:$0xff]
        %v1239 = vld [vmem:[%s1111 + $0x3f8] sm:$0xff]
        %1240 = vmatpush.msra.mxu0 %v1142
        %1241 = vmatpush.msra.mxu0 %v1140
        %1242 = vmatpush.msra.mxu0 %v1138
        %1243 = vmatpush.msra.mxu0 %v1136
        %1244 = vmatpush.msra.mxu0 %v1134
        %1245 = vmatpush.msra.mxu0 %v1132
        %1246 = vmatpush.msra.mxu0 %v1130
        %1247 = vmatpush.msra.mxu0 %v1128
        %1248 = vmatpush.msra.mxu0 %v1126
        %1249 = vmatpush.msra.mxu0 %v1124
        %1250 = vmatpush.msra.mxu0 %v1122
        %1251 = vmatpush.msra.mxu0 %v1120
        %1252 = vmatpush.msra.mxu0 %v1118
        %1253 = vmatpush.msra.mxu0 %v1116
        %1254 = vmatpush.msra.mxu0 %v1114
        %1255 = vmatpush.msra.mxu0 %v1112
        %1256 = vmatmul.f32.gmra.mxu0 %v503
        %v1257 = vpop.f32.mrf.mxu0
        %v1258 = vadd.f32 0.0, %v1257
        %1259 = vmatmul.f32.gmra.mxu0 %v505
        %v1260 = vpop.f32.mrf.mxu0
        %v1261 = vadd.f32 0.0, %v1260
        %1262 = vmatmul.f32.gmra.mxu0 %v508
        %v1263 = vpop.f32.mrf.mxu0
        %v1264 = vadd.f32 0.0, %v1263
        %1265 = vmatmul.f32.gmra.mxu0 %v510
        %v1266 = vpop.f32.mrf.mxu0
        %v1267 = vadd.f32 0.0, %v1266
        %1268 = vmatmul.f32.gmra.mxu0 %v513
        %v1269 = vpop.f32.mrf.mxu0
        %v1270 = vadd.f32 0.0, %v1269
        %1271 = vmatmul.f32.gmra.mxu0 %v515
        %v1272 = vpop.f32.mrf.mxu0
        %v1273 = vadd.f32 0.0, %v1272
        %1274 = vmatmul.f32.gmra.mxu0 %v518
        %v1275 = vpop.f32.mrf.mxu0
        %v1276 = vadd.f32 0.0, %v1275
        %1277 = vmatmul.f32.gmra.mxu0 %v520
        %v1278 = vpop.f32.mrf.mxu0
        %v1279 = vadd.f32 0.0, %v1278
        %1280 = vmatmul.f32.gmra.mxu0 %v523
        %v1281 = vpop.f32.mrf.mxu0
        %1282 = vmatmul.f32.gmra.mxu0 %v525
        %v1283 = vpop.f32.mrf.mxu0
        %1284 = vdwg.mxu0
        %1285 = vmatpush.msra.mxu0 %v1174
        %1286 = vmatpush.msra.mxu0 %v1172
        %1287 = vmatpush.msra.mxu0 %v1170
        %1288 = vmatpush.msra.mxu0 %v1168
        %1289 = vmatpush.msra.mxu0 %v1166
        %1290 = vmatpush.msra.mxu0 %v1164
        %1291 = vmatpush.msra.mxu0 %v1162
        %1292 = vmatpush.msra.mxu0 %v1160
        %1293 = vmatpush.msra.mxu0 %v1158
        %1294 = vmatpush.msra.mxu0 %v1156
        %1295 = vmatpush.msra.mxu0 %v1154
        %1296 = vmatpush.msra.mxu0 %v1152
        %1297 = vmatpush.msra.mxu0 %v1150
        %1298 = vmatpush.msra.mxu0 %v1148
        %1299 = vmatpush.msra.mxu0 %v1146
        %1300 = vmatpush.msra.mxu0 %v1144
        %1301 = vmatmul.f32.gmra.mxu0 %v1071
        %v1302 = vpop.f32.mrf.mxu0
        %v1303 = vadd.f32 %v1258, %v1302
        %1304 = vmatmul.f32.gmra.mxu0 %v1076
        %v1305 = vpop.f32.mrf.mxu0
        %v1306 = vadd.f32 %v1261, %v1305
        %1307 = vmatmul.f32.gmra.mxu0 %v1074
        %v1308 = vpop.f32.mrf.mxu0
        %v1309 = vadd.f32 %v1264, %v1308
        %1310 = vmatmul.f32.gmra.mxu0 %v1078
        %v1311 = vpop.f32.mrf.mxu0
        %v1312 = vadd.f32 %v1267, %v1311
        %1313 = vmatmul.f32.gmra.mxu0 %v1081
        %v1314 = vpop.f32.mrf.mxu0
        %v1315 = vadd.f32 %v1270, %v1314
        %1316 = vmatmul.f32.gmra.mxu0 %v1083
        %v1317 = vpop.f32.mrf.mxu0
        %v1318 = vadd.f32 %v1273, %v1317
        %1319 = vmatmul.f32.gmra.mxu0 %v1086
        %v1320 = vpop.f32.mrf.mxu0
        %v1321 = vadd.f32 %v1276, %v1320
        %1322 = vmatmul.f32.gmra.mxu0 %v1088
        %v1323 = vpop.f32.mrf.mxu0
        %v1324 = vadd.f32 %v1279, %v1323
        %1325 = vmatmul.f32.gmra.mxu0 %v1091
        %v1326 = vpop.f32.mrf.mxu0
        %1327 = vmatmul.f32.gmra.mxu0 %v1093
        %v1328 = vpop.f32.mrf.mxu0
        %1329 = vdwg.mxu0
        %1330 = vmatpush.msra.mxu0 %v1206
        %1331 = vmatpush.msra.mxu0 %v1204
        %1332 = vmatpush.msra.mxu0 %v1202
        %1333 = vmatpush.msra.mxu0 %v1200
        %1334 = vmatpush.msra.mxu0 %v1198
        %1335 = vmatpush.msra.mxu0 %v1196
        %1336 = vmatpush.msra.mxu0 %v1194
        %1337 = vmatpush.msra.mxu0 %v1192
        %1338 = vmatpush.msra.mxu0 %v1190
        %1339 = vmatpush.msra.mxu0 %v1188
        %1340 = vmatpush.msra.mxu0 %v1186
        %1341 = vmatpush.msra.mxu0 %v1184
        %1342 = vmatpush.msra.mxu0 %v1182
        %1343 = vmatpush.msra.mxu0 %v1180
        %1344 = vmatpush.msra.mxu0 %v1178
        %1345 = vmatpush.msra.mxu0 %v1176
        %1346 = vmatmul.f32.gmra.mxu0 %v508
        %v1347 = vpop.f32.mrf.mxu0
        %v1348 = vadd.f32 %v1303, %v1347
        %1349 = vmatmul.f32.gmra.mxu0 %v510
        %v1350 = vpop.f32.mrf.mxu0
        %v1351 = vadd.f32 %v1306, %v1350
        %1352 = vmatmul.f32.gmra.mxu0 %v513
        %v1353 = vpop.f32.mrf.mxu0
        %v1354 = vadd.f32 %v1309, %v1353
        %1355 = vmatmul.f32.gmra.mxu0 %v515
        %v1356 = vpop.f32.mrf.mxu0
        %v1357 = vadd.f32 %v1312, %v1356
        %1358 = vmatmul.f32.gmra.mxu0 %v518
        %v1359 = vpop.f32.mrf.mxu0
        %v1360 = vadd.f32 %v1315, %v1359
        %1361 = vmatmul.f32.gmra.mxu0 %v520
        %v1362 = vpop.f32.mrf.mxu0
        %v1363 = vadd.f32 %v1318, %v1362
        %1364 = vmatmul.f32.gmra.mxu0 %v523
        %v1365 = vpop.f32.mrf.mxu0
        %v1366 = vadd.f32 %v1321, %v1365
        %1367 = vmatmul.f32.gmra.mxu0 %v525
        %v1368 = vpop.f32.mrf.mxu0
        %v1369 = vadd.f32 %v1324, %v1368
        %1370 = vmatmul.f32.gmra.mxu0 %v540
        %v1371 = vpop.f32.mrf.mxu0
        %1372 = vmatmul.f32.gmra.mxu0 %v542
        %v1373 = vpop.f32.mrf.mxu0
        %1374 = vdwg.mxu0
        %1375 = vmatpush.msra.mxu0 %v1238
        %1376 = vmatpush.msra.mxu0 %v1236
        %1377 = vmatpush.msra.mxu0 %v1234
        %1378 = vmatpush.msra.mxu0 %v1232
        %1379 = vmatpush.msra.mxu0 %v1230
        %1380 = vmatpush.msra.mxu0 %v1228
        %1381 = vmatpush.msra.mxu0 %v1226
        %1382 = vmatpush.msra.mxu0 %v1224
        %1383 = vmatpush.msra.mxu0 %v1222
        %1384 = vmatpush.msra.mxu0 %v1220
        %1385 = vmatpush.msra.mxu0 %v1218
        %1386 = vmatpush.msra.mxu0 %v1216
        %1387 = vmatpush.msra.mxu0 %v1214
        %1388 = vmatpush.msra.mxu0 %v1212
        %1389 = vmatpush.msra.mxu0 %v1210
        %1390 = vmatpush.msra.mxu0 %v1208
        %1391 = vmatmul.f32.gmra.mxu0 %v1074
        %v1392 = vpop.f32.mrf.mxu0
        %v1393 = vadd.f32 %v1348, %v1392
        %1394 = vmatmul.f32.gmra.mxu0 %v1078
        %v1395 = vpop.f32.mrf.mxu0
        %v1396 = vadd.f32 %v1351, %v1395
        %1397 = vmatmul.f32.gmra.mxu0 %v1081
        %v1398 = vpop.f32.mrf.mxu0
        %v1399 = vadd.f32 %v1354, %v1398
        %1400 = vmatmul.f32.gmra.mxu0 %v1083
        %v1401 = vpop.f32.mrf.mxu0
        %v1402 = vadd.f32 %v1357, %v1401
        %1403 = vmatmul.f32.gmra.mxu0 %v1086
        %v1404 = vpop.f32.mrf.mxu0
        %v1405 = vadd.f32 %v1360, %v1404
        %1406 = vmatmul.f32.gmra.mxu0 %v1088
        %v1407 = vpop.f32.mrf.mxu0
        %v1408 = vadd.f32 %v1363, %v1407
        %1409 = vmatmul.f32.gmra.mxu0 %v1091
        %v1410 = vpop.f32.mrf.mxu0
        %v1411 = vadd.f32 %v1366, %v1410
        %1412 = vmatmul.f32.gmra.mxu0 %v1093
        %v1413 = vpop.f32.mrf.mxu0
        %v1414 = vadd.f32 %v1369, %v1413
        %1415 = vmatmul.f32.gmra.mxu0 %v1096
        %v1416 = vpop.f32.mrf.mxu0
        %1417 = vmatmul.f32.gmra.mxu0 %v1098
        %v1418 = vpop.f32.mrf.mxu0
        %1419 = vdwg.mxu0
        %1420 = vmatpush.msra.mxu0 %v1143
        %1421 = vmatpush.msra.mxu0 %v1141
        %1422 = vmatpush.msra.mxu0 %v1139
        %1423 = vmatpush.msra.mxu0 %v1137
        %1424 = vmatpush.msra.mxu0 %v1135
        %1425 = vmatpush.msra.mxu0 %v1133
        %1426 = vmatpush.msra.mxu0 %v1131
        %1427 = vmatpush.msra.mxu0 %v1129
        %1428 = vmatpush.msra.mxu0 %v1127
        %1429 = vmatpush.msra.mxu0 %v1125
        %1430 = vmatpush.msra.mxu0 %v1123
        %1431 = vmatpush.msra.mxu0 %v1121
        %1432 = vmatpush.msra.mxu0 %v1119
        %1433 = vmatpush.msra.mxu0 %v1117
        %1434 = vmatpush.msra.mxu0 %v1115
        %1435 = vmatpush.msra.mxu0 %v1113
        %1436 = vmatmul.f32.gmra.mxu0 %v503
        %v1437 = vpop.f32.mrf.mxu0
        %1438 = vmatmul.f32.gmra.mxu0 %v505
        %v1439 = vpop.f32.mrf.mxu0
        %1440 = vmatmul.f32.gmra.mxu0 %v508
        %v1441 = vpop.f32.mrf.mxu0
        %v1442 = vadd.f32 0.0, %v1441
        %1443 = vmatmul.f32.gmra.mxu0 %v510
        %v1444 = vpop.f32.mrf.mxu0
        %v1445 = vadd.f32 0.0, %v1444
        %1446 = vmatmul.f32.gmra.mxu0 %v513
        %v1447 = vpop.f32.mrf.mxu0
        %v1448 = vadd.f32 0.0, %v1447
        %1449 = vmatmul.f32.gmra.mxu0 %v515
        %v1450 = vpop.f32.mrf.mxu0
        %v1451 = vadd.f32 0.0, %v1450
        %1452 = vmatmul.f32.gmra.mxu0 %v518
        %v1453 = vpop.f32.mrf.mxu0
        %v1454 = vadd.f32 0.0, %v1453
        %1455 = vmatmul.f32.gmra.mxu0 %v520
        %v1456 = vpop.f32.mrf.mxu0
        %v1457 = vadd.f32 0.0, %v1456
        %1458 = vmatmul.f32.gmra.mxu0 %v523
        %v1459 = vpop.f32.mrf.mxu0
        %v1460 = vadd.f32 0.0, %v1459
        %1461 = vmatmul.f32.gmra.mxu0 %v525
        %v1462 = vpop.f32.mrf.mxu0
        %v1463 = vadd.f32 0.0, %v1462
        %1464 = vdwg.mxu0
        %1465 = vmatpush.msra.mxu0 %v1175
        %1466 = vmatpush.msra.mxu0 %v1173
        %1467 = vmatpush.msra.mxu0 %v1171
        %1468 = vmatpush.msra.mxu0 %v1169
        %1469 = vmatpush.msra.mxu0 %v1167
        %1470 = vmatpush.msra.mxu0 %v1165
        %1471 = vmatpush.msra.mxu0 %v1163
        %1472 = vmatpush.msra.mxu0 %v1161
        %1473 = vmatpush.msra.mxu0 %v1159
        %1474 = vmatpush.msra.mxu0 %v1157
        %1475 = vmatpush.msra.mxu0 %v1155
        %1476 = vmatpush.msra.mxu0 %v1153
        %1477 = vmatpush.msra.mxu0 %v1151
        %1478 = vmatpush.msra.mxu0 %v1149
        %1479 = vmatpush.msra.mxu0 %v1147
        %1480 = vmatpush.msra.mxu0 %v1145
        %1481 = vmatmul.f32.gmra.mxu0 %v1071
        %v1482 = vpop.f32.mrf.mxu0
        %1483 = vmatmul.f32.gmra.mxu0 %v1076
        %v1484 = vpop.f32.mrf.mxu0
        %1485 = vmatmul.f32.gmra.mxu0 %v1074
        %v1486 = vpop.f32.mrf.mxu0
        %v1487 = vadd.f32 %v1442, %v1486
        %1488 = vmatmul.f32.gmra.mxu0 %v1078
        %v1489 = vpop.f32.mrf.mxu0
        %v1490 = vadd.f32 %v1445, %v1489
        %1491 = vmatmul.f32.gmra.mxu0 %v1081
        %v1492 = vpop.f32.mrf.mxu0
        %v1493 = vadd.f32 %v1448, %v1492
        %1494 = vmatmul.f32.gmra.mxu0 %v1083
        %v1495 = vpop.f32.mrf.mxu0
        %v1496 = vadd.f32 %v1451, %v1495
        %1497 = vmatmul.f32.gmra.mxu0 %v1086
        %v1498 = vpop.f32.mrf.mxu0
        %v1499 = vadd.f32 %v1454, %v1498
        %1500 = vmatmul.f32.gmra.mxu0 %v1088
        %v1501 = vpop.f32.mrf.mxu0
        %v1502 = vadd.f32 %v1457, %v1501
        %1503 = vmatmul.f32.gmra.mxu0 %v1091
        %v1504 = vpop.f32.mrf.mxu0
        %v1505 = vadd.f32 %v1460, %v1504
        %1506 = vmatmul.f32.gmra.mxu0 %v1093
        %v1507 = vpop.f32.mrf.mxu0
        %v1508 = vadd.f32 %v1463, %v1507
        %1509 = vdwg.mxu0
        %1510 = vmatpush.msra.mxu0 %v1207
        %1511 = vmatpush.msra.mxu0 %v1205
        %1512 = vmatpush.msra.mxu0 %v1203
        %1513 = vmatpush.msra.mxu0 %v1201
        %1514 = vmatpush.msra.mxu0 %v1199
        %1515 = vmatpush.msra.mxu0 %v1197
        %1516 = vmatpush.msra.mxu0 %v1195
        %1517 = vmatpush.msra.mxu0 %v1193
        %1518 = vmatpush.msra.mxu0 %v1191
        %1519 = vmatpush.msra.mxu0 %v1189
        %1520 = vmatpush.msra.mxu0 %v1187
        %1521 = vmatpush.msra.mxu0 %v1185
        %1522 = vmatpush.msra.mxu0 %v1183
        %1523 = vmatpush.msra.mxu0 %v1181
        %1524 = vmatpush.msra.mxu0 %v1179
        %1525 = vmatpush.msra.mxu0 %v1177
        %1526 = vmatmul.f32.gmra.mxu0 %v508
        %v1527 = vpop.f32.mrf.mxu0
        %1528 = vmatmul.f32.gmra.mxu0 %v510
        %v1529 = vpop.f32.mrf.mxu0
        %1530 = vmatmul.f32.gmra.mxu0 %v513
        %v1531 = vpop.f32.mrf.mxu0
        %v1532 = vadd.f32 %v1487, %v1531
        %1533 = vmatmul.f32.gmra.mxu0 %v515
        %v1534 = vpop.f32.mrf.mxu0
        %v1535 = vadd.f32 %v1490, %v1534
        %1536 = vmatmul.f32.gmra.mxu0 %v518
        %v1537 = vpop.f32.mrf.mxu0
        %v1538 = vadd.f32 %v1493, %v1537
        %1539 = vmatmul.f32.gmra.mxu0 %v520
        %v1540 = vpop.f32.mrf.mxu0
        %v1541 = vadd.f32 %v1496, %v1540
        %1542 = vmatmul.f32.gmra.mxu0 %v523
        %v1543 = vpop.f32.mrf.mxu0
        %v1544 = vadd.f32 %v1499, %v1543
        %1545 = vmatmul.f32.gmra.mxu0 %v525
        %v1546 = vpop.f32.mrf.mxu0
        %v1547 = vadd.f32 %v1502, %v1546
        %1548 = vmatmul.f32.gmra.mxu0 %v540
        %v1549 = vpop.f32.mrf.mxu0
        %v1550 = vadd.f32 %v1505, %v1549
        %1551 = vmatmul.f32.gmra.mxu0 %v542
        %v1552 = vpop.f32.mrf.mxu0
        %v1553 = vadd.f32 %v1508, %v1552
        %1554 = vdwg.mxu0
        %1555 = vmatpush.msra.mxu0 %v1239
        %1556 = vmatpush.msra.mxu0 %v1237
        %1557 = vmatpush.msra.mxu0 %v1235
        %1558 = vmatpush.msra.mxu0 %v1233
        %1559 = vmatpush.msra.mxu0 %v1231
        %1560 = vmatpush.msra.mxu0 %v1229
        %1561 = vmatpush.msra.mxu0 %v1227
        %1562 = vmatpush.msra.mxu0 %v1225
        %1563 = vmatpush.msra.mxu0 %v1223
        %1564 = vmatpush.msra.mxu0 %v1221
        %1565 = vmatpush.msra.mxu0 %v1219
        %1566 = vmatpush.msra.mxu0 %v1217
        %1567 = vmatpush.msra.mxu0 %v1215
        %1568 = vmatpush.msra.mxu0 %v1213
        %1569 = vmatpush.msra.mxu0 %v1211
        %1570 = vmatpush.msra.mxu0 %v1209
        %1571 = vmatmul.f32.gmra.mxu0 %v1074
        %v1572 = vpop.f32.mrf.mxu0
        %1573 = vmatmul.f32.gmra.mxu0 %v1078
        %v1574 = vpop.f32.mrf.mxu0
        %1575 = vmatmul.f32.gmra.mxu0 %v1081
        %v1576 = vpop.f32.mrf.mxu0
        %v1577 = vadd.f32 %v1532, %v1576
        %1578 = vmatmul.f32.gmra.mxu0 %v1083
        %v1579 = vpop.f32.mrf.mxu0
        %v1580 = vadd.f32 %v1535, %v1579
        %1581 = vmatmul.f32.gmra.mxu0 %v1086
        %v1582 = vpop.f32.mrf.mxu0
        %v1583 = vadd.f32 %v1538, %v1582
        %1584 = vmatmul.f32.gmra.mxu0 %v1088
        %v1585 = vpop.f32.mrf.mxu0
        %v1586 = vadd.f32 %v1541, %v1585
        %1587 = vmatmul.f32.gmra.mxu0 %v1091
        %v1588 = vpop.f32.mrf.mxu0
        %v1589 = vadd.f32 %v1544, %v1588
        %1590 = vmatmul.f32.gmra.mxu0 %v1093
        %v1591 = vpop.f32.mrf.mxu0
        %v1592 = vadd.f32 %v1547, %v1591
        %1593 = vmatmul.f32.gmra.mxu0 %v1096
        %v1594 = vpop.f32.mrf.mxu0
        %v1595 = vadd.f32 %v1550, %v1594
        %1596 = vmatmul.f32.gmra.mxu0 %v1098
        %v1597 = vpop.f32.mrf.mxu0
        %v1598 = vadd.f32 %v1553, %v1597
        %1599 = vdwg.mxu0
        %v1600 = vadd.f32 %v1393, %v1034
        %v1601 = vadd.f32 %v1396, %v1034
        %v1602 = vadd.f32 %v1399, %v1034
        %v1603 = vadd.f32 %v1402, %v1034
        %v1604 = vadd.f32 %v1405, %v1034
        %v1605 = vadd.f32 %v1408, %v1034
        %v1606 = vadd.f32 %v1411, %v1034
        %v1607 = vadd.f32 %v1414, %v1034
        %s1608 = scalar_lea.vmem %s393, 64 [#allocation10]
        %1609 = vst [vmem:[%s1608] sm:$0xff] %v1600
        %1610 = vst [vmem:[%s1608 + $0x8] sm:$0xff] %v1601
        %1611 = vst [vmem:[%s1608 + $0x10] sm:$0xff] %v1602
        %1612 = vst [vmem:[%s1608 + $0x18] sm:$0xff] %v1603
        %1613 = vst [vmem:[%s1608 + $0x20] sm:$0xff] %v1604
        %1614 = vst [vmem:[%s1608 + $0x28] sm:$0xff] %v1605
        %1615 = vst [vmem:[%s1608 + $0x30] sm:$0xff] %v1606
        %1616 = vst [vmem:[%s1608 + $0x38] sm:$0xff] %v1607
        %v1617 = vadd.f32 %v1577, %v1034
        %v1618 = vadd.f32 %v1580, %v1034
        %v1619 = vadd.f32 %v1583, %v1034
        %v1620 = vadd.f32 %v1586, %v1034
        %v1621 = vadd.f32 %v1589, %v1034
        %v1622 = vadd.f32 %v1592, %v1034
        %v1623 = vadd.f32 %v1595, %v1034
        %v1624 = vadd.f32 %v1598, %v1034
        %s1625 = scalar_lea.vmem %s393, 192 [#allocation10]
        %1626 = vst [vmem:[%s1625] sm:$0xff] %v1617
        %1627 = vst [vmem:[%s1625 + $0x8] sm:$0xff] %v1618
        %1628 = vst [vmem:[%s1625 + $0x10] sm:$0xff] %v1619
        %1629 = vst [vmem:[%s1625 + $0x18] sm:$0xff] %v1620
        %1630 = vst [vmem:[%s1625 + $0x20] sm:$0xff] %v1621
        %1631 = vst [vmem:[%s1625 + $0x28] sm:$0xff] %v1622
        %1632 = vst [vmem:[%s1625 + $0x30] sm:$0xff] %v1623
        %1633 = vst [vmem:[%s1625 + $0x38] sm:$0xff] %v1624
        %s1634 = sand.u32 %s190, 1
        %s1635 = scalar_lea.sflag [#allocation4], %s1634
        %s1636 = sand.u32 %s190, 1
        %s1637 = smul.addr %s1636, 256
        %s1638 = scalar_lea.vmem [#allocation10], %s1637
        // Predicated region
        $region57: #{tpu_custom_call.1} parent=39 // pred_check
          %p1639 = pneg %p200
        $region58: #{tpu_custom_call.1} parent=39 // pred_check_branch
          %1641 = sbr.rel (%p1639) target = $region60
        $region59: #{tpu_custom_call.1} parent=39 // pred_region
          #allocation12 [shape = 'u32[6]{0}', space=smem, size = 0x18, scoped, tag = 'DMA stride descriptor']
          %s1642 = smul.u32 4, %s31
          %1644 = vsyncadd %s1635, 0
          %s1645 = smul.addr %s1642, 2
          %s1646 = smul.addr %s30, 128
          %s1647 = sadd.s32 %s1645, %s1646
          %s1648 = smul.addr %s1647, 8
          %s1649 = scalar_lea.hbm %s5, %s1648
          %s1651 = sshll.u32 1, 14
          %s1652 = sxor.u32 4294967295, %s1651
          %s1655 = sshll.u32 7, 18
          %s1656 = sxor.u32 4294967295, %s1655
          %s1657 = sand.u32 0, %s1656
          %s1659 = sor.u32 %s1657, 0
          %s1660 = sshll.u32 %s1638, 4
          %s1661 = int_to_ptr.vmem [resolvable:$true] %s1660
          %s1662 = sshll.u32 %s1649, 4
          %s1663 = int_to_ptr.hbm [resolvable:$true] %s1662
          %1669 = sst [smem:[#allocation12]] 1024
          %s1670 = scalar_lea.smem [#allocation12], 1
          %1671 = sst [smem:[%s1670]] 4096
          %s1672 = scalar_lea.smem [#allocation12], 2
          %1673 = sst [smem:[%s1672]] 8
          %s1674 = scalar_lea.smem [#allocation12], 3
          %1675 = sst [smem:[%s1674]] 128
          %s1676 = scalar_lea.smem [#allocation12], 4
          %1677 = sst [smem:[%s1676]] 128
          %s1678 = scalar_lea.smem [#allocation12], 5
          %1679 = sst [smem:[%s1678]] 8
          %1681 = dma.general %s1661, 4096, %s1663, %s1635, [#allocation11], [#allocation12], %s1659, 0
        $region60: #{tpu_custom_call.1} parent=39 // pred_fallthru
          _
      $region40: #{tpu_custom_call.1} parent=5 // pred_fallthru
        _
      %p1682 = scmp.le.s32.totalorder 2, %s21
      // Predicated region
      $region61: #{tpu_custom_call.1} parent=5 // pred_check
        %p1683 = pneg %p1682
      $region62: #{tpu_custom_call.1} parent=5 // pred_check_branch
        %1685 = sbr.rel (%p1683) target = $region64
      $region63: #{tpu_custom_call.1} parent=5 // pred_region
        %s1686 = ssub.s32 %s21, 2
        // Predicated region
        $region65: #{tpu_custom_call.1} parent=63 // pred_check
          %p1687 = pneg %p206
        $region66: #{tpu_custom_call.1} parent=63 // pred_check_branch
          %1689 = sbr.rel (%p1687) target = $region68
        $region67: #{tpu_custom_call.1} parent=63 // pred_region
          %s1690 = sand.u32 %s191, 1
          %s1691 = scalar_lea.sflag [#allocation4], %s1690
          %s1692 = sand.u32 %s191, 1
          %s1693 = smul.addr %s1692, 256
          %s1694 = scalar_lea.vmem [#allocation10], %s1693
          %1696 = dma.done %s1691, 4096
        $region68: #{tpu_custom_call.1} parent=63 // pred_fallthru
          _
      $region64: #{tpu_custom_call.1} parent=5 // pred_fallthru
        _
    $region6: #{tpu_custom_call.1} parent=1 // loop_footer
      %s25 = sadd.s32 1, %s21
    $region7: #{tpu_custom_call.1} parent=1 // loop_footer_branch
      %20 = sbr.rel target = $region3
    $region8: #{tpu_custom_call.1} parent=1 // loop_exit
      _
    %1697 = vsyncpa [#allocation3], 1
    %s1698 = scalar_lea.sflag [#allocation3], 1
    %1699 = vsyncpa %s1698, 1
    %1700 = vsyncpa [#allocation6], 1
    %s1701 = scalar_lea.sflag [#allocation6], 1
    %1702 = vsyncpa %s1701, 1
    %1703 = vsyncpa [#allocation9], 1
    %1704 = vsyncpa [#allocation4], 1
    %s1705 = scalar_lea.sflag [#allocation4], 1
    %1706 = vsyncpa %s1705, 1

</llo_original>
